<compile_context>
chip_gen: v6e
topology: v6e:2x2x1
jax: 0.10.0
libtpu: 0.0.40
codegen_flags: <defaults>
</compile_context>

<pallas_src>
import numpy as np

import jax
import jax.numpy as jnp
from jax.experimental import pallas as pl
from jax.experimental.pallas import tpu as pltpu


# ------------------------- model configuration (small, Swin-like) -------------------------
TASKS = ("semseg", "depth")
NUM_OUTPUTS = {"semseg": 5, "depth": 1}          # config.TASKS_CONFIG.ALL_TASKS.NUM_OUTPUT
IMG_SIZE = 64                                    # config.DATA.IMG_SIZE
PATCH = 4
EMBED_DIM = 16
NUM_LAYERS = 4
PATCHES_RES = IMG_SIZE // PATCH                  # patch_embed.patches_resolution = 16
# dims / input_res exactly as computed in MultiTaskSwin.__init__
DIMS = [int(EMBED_DIM * 2 ** (i + 1 if i < NUM_LAYERS - 1 else i)) for i in range(NUM_LAYERS)]
INPUT_RES = [PATCHES_RES // 2 ** (i + 1 if i < NUM_LAYERS - 1 else i) for i in range(NUM_LAYERS)]
DECODER_CHANNELS = [16, 16, 16, 16]              # config.MODEL.DECODER_CHANNELS (DOWNSAMPLER on)
HEAD_HIDDEN = 32
IN_CHANNELS = 3
C_PAD = 4                                        # channels padded to 4 so lanes = 4*64 = 256

N_TASKS = len(TASKS)
H0 = INPUT_RES[0]                                # 8 = finest decoder resolution
C_STAGE = DECODER_CHANNELS[0]                    # 16 (all stages equal)
CAT_C = sum(DECODER_CHANNELS)                    # 64 per task
OUT_PAD = 8                                      # output channels padded (5 semseg + 1 depth + 2 pad)
QHID = H0 * N_TASKS * HEAD_HIDDEN                # 512 = (q, task*hidden) lane width
CHX = OUT_PAD * IMG_SIZE                         # 512 = (channel, x-col) lane width
KSTAGE = C_PAD * IMG_SIZE                        # 256 = (channel, w) contraction width per stage


# ----------------------------- static spatial (bilinear / pool) matrices -----------------------------
def bilinear_matrix(out_size, in_size):
    """Interpolation matrix matching torch F.interpolate(mode='bilinear', align_corners=False)."""
    if out_size == in_size:
        return np.eye(out_size, dtype=np.float32)
    scale = in_size / out_size
    dst = np.arange(out_size, dtype=np.float64)
    src = (dst + 0.5) * scale - 0.5
    src = np.maximum(src, 0.0)
    lo = np.minimum(np.floor(src).astype(np.int64), in_size - 1)
    hi = np.minimum(lo + 1, in_size - 1)
    lam = src - lo
    m = np.zeros((out_size, in_size), dtype=np.float64)
    m[np.arange(out_size), lo] += 1.0 - lam
    m[np.arange(out_size), hi] += lam
    return m.astype(np.float32)


def _stage_resample_matrices():
    """A_i = bilinear(8 <- r_i) @ avgpool(r_i <- 64): maps a length-64 spatial axis to the
    8-res decoder grid of stage i (used for both rows and cols)."""
    mats = []
    for i in range(NUM_LAYERS):
        r = INPUT_RES[i]
        f = IMG_SIZE // r
        pool = np.zeros((r, IMG_SIZE), np.float32)
        for u in range(r):
            pool[u, u * f:(u + 1) * f] = 1.0 / f
        mats.append(bilinear_matrix(H0, r) @ pool)
    return np.stack(mats, 0)                                       # (4, 8, 64)


_A_NP = _stage_resample_matrices()                                 # (4, 8, 64)
_U_NP = bilinear_matrix(IMG_SIZE, H0)                              # (64, 8) final upsample


def _batch_shuffle_matrices(bt):
    """L[(i,b,p),(b',h)] = δ_bb' A_i[p,h]   (row-resample, all stages, all images in tile)
       Lup[(b,y),(b',p)] = δ_bb' U[y,p]     (p-contraction of the final upsample)"""
    l_mat = np.zeros((NUM_LAYERS * bt * H0, bt * IMG_SIZE), np.float32)
    for i in range(NUM_LAYERS):
        for b in range(bt):
            r0 = i * bt * H0 + b * H0
            l_mat[r0:r0 + H0, b * IMG_SIZE:(b + 1) * IMG_SIZE] = _A_NP[i]
    lup = np.zeros((bt * IMG_SIZE, bt * H0), np.float32)
    for b in range(bt):
        lup[b * IMG_SIZE:(b + 1) * IMG_SIZE, b * H0:(b + 1) * H0] = _U_NP
    return l_mat, lup


# ------------------------------------ fused Pallas kernel ------------------------------------
def _mtl_swin_kernel(x_ref, l_ref, gw_ref, wfold_ref, lup_ref, o_ref):
    # x_ref:     (Bt*64, 256)        bf16  rows (b, h),      lanes (c_pad, w)
    # l_ref:     (4*Bt*8, Bt*64)     bf16  rows (stage,b,p), cols (b, h)
    # gw_ref:    (4*256, 512)        bf16  per-stage rows (c_pad, w), cols (q, task*hidden)
    # wfold_ref: (512, 512)          bf16  rows (q, task*hidden), cols (out_ch, x)
    # lup_ref:   (Bt*64, Bt*8)       bf16  rows (b, y), cols (b, p)
    # o_ref:     (Bt*64, 512)        f32   rows (b, y), cols (out_ch, x)
    rows = l_ref.shape[0] // NUM_LAYERS                            # Bt*8

    # 1) row-resample (h -> p) for all stages & all images of the tile in ONE matmul.
    v = jnp.dot(l_ref[...], x_ref[...], preferred_element_type=jnp.float32)  # (4*Bt*8, 256)

    # 2) per-stage col-resample + channel projection + head W1, folded offline into GW_i,
    #    accumulated over stages -> pre-ReLU hidden, lanes (q, task*hidden).
    def stage_dot(i):
        vi = v[i * rows:(i + 1) * rows].astype(jnp.bfloat16)       # (Bt*8, 256), rows (b, p)
        return jnp.dot(vi, gw_ref[i * KSTAGE:(i + 1) * KSTAGE],
                       preferred_element_type=jnp.float32)         # (Bt*8, 512)

    h_pre = stage_dot(0)
    for i in range(1, NUM_LAYERS):
        h_pre = h_pre + stage_dot(i)

    h = jnp.maximum(h_pre, 0.0).astype(jnp.bfloat16)               # ReLU, (Bt*8, 512)

    # 3) head W2 folded with the q-contraction of the final bilinear upsample.
    t1 = jnp.dot(h, wfold_ref[...], preferred_element_type=jnp.float32)      # (Bt*8, 512)

    # 4) p-contraction of the final upsample; single lane-dense (512-wide) store.
    o_ref[...] = jnp.dot(lup_ref[...], t1.astype(jnp.bfloat16),
                         preferred_element_type=jnp.float32)       # (Bt*64, 512)


# -------------------------------------- parameters --------------------------------------
def init_params(key):
    params = {"backbone": [], "downsampler": {}, "head": {}}
    k_bb, k_ds, k_head = jax.random.split(key, 3)

    # TODO(synk): the real Swin backbone (window attention / MLP / patch merging) is an
    # external encoder passed into __init__; a per-stage pooling + linear projection stands in.
    bb_keys = jax.random.split(k_bb, NUM_LAYERS)
    for i in range(NUM_LAYERS):
        params["backbone"].append(
            (1.0 / np.sqrt(IN_CHANNELS))
            * jax.random.normal(bb_keys[i], (IN_CHANNELS, DIMS[i]), jnp.float32))

    ds_keys = jax.random.split(k_ds, N_TASKS)
    head_keys = jax.random.split(k_head, N_TASKS)
    for t, task in enumerate(TASKS):
        sk = jax.random.split(ds_keys[t], NUM_LAYERS)
        # Downsampler: per-scale 1x1 Conv2d(dims[i] -> channels[i], bias=False)
        params["downsampler"][task] = [
            (1.0 / np.sqrt(DIMS[i]))
            * jax.random.normal(sk[i], (DIMS[i], DECODER_CHANNELS[i]), jnp.float32)
            for i in range(NUM_LAYERS)]
        hk1, hk2 = jax.random.split(head_keys[t])
        # TODO(synk): simplified HRNet-style head (upsample+concat, 1x1 conv + ReLU, 1x1 conv);
        # the BatchNorm of models/seg_hrnet.HighResolutionHead is omitted.
        params["head"][task] = {
            "w1": (1.0 / np.sqrt(CAT_C))
                  * jax.random.normal(hk1, (CAT_C, HEAD_HIDDEN), jnp.float32),
            "w2": (1.0 / np.sqrt(HEAD_HIDDEN))
                  * jax.random.normal(hk2, (HEAD_HIDDEN, NUM_OUTPUTS[task]), jnp.float32),
        }
    return params


def _pack_weights(params):
    """Fold (backbone @ per-task downsampler @ head-W1) with the per-stage column resample
    into GW_i, and fold (head-W2) with the q-contraction of the final upsample into Wfold."""
    # W1 packed across tasks/stages: rows (stage, task, k), cols (task, hidden)  -> (128, 64)
    w1pack = jnp.zeros((NUM_LAYERS * N_TASKS * C_STAGE, N_TASKS * HEAD_HIDDEN), jnp.float32)
    for t, task in enumerate(TASKS):
        w1_t = params["head"][task]["w1"]                          # (64, 32), rows (stage, k)
        for i in range(NUM_LAYERS):
            r0 = i * N_TASKS * C_STAGE + t * C_STAGE
            w1pack = w1pack.at[r0:r0 + C_STAGE,
                               t * HEAD_HIDDEN:(t + 1) * HEAD_HIDDEN].set(
                w1_t[i * C_STAGE:(i + 1) * C_STAGE])

    # W2 packed: rows (task, hidden), cols = [semseg 0..4 | depth 5 | pad 6..7] -> (64, 8)
    w2pack = jnp.zeros((N_TASKS * HEAD_HIDDEN, OUT_PAD), jnp.float32)
    col = 0
    for t, task in enumerate(TASKS):
        n_o = NUM_OUTPUTS[task]
        w2pack = w2pack.at[t * HEAD_HIDDEN:(t + 1) * HEAD_HIDDEN, col:col + n_o].set(
            params["head"][task]["w2"])
        col += n_o

    # GW_i[(c,w),(q,hid)] = A_i[q,w] * (wcomb_i @ W1pack_i)[c,hid], channel padded to C_PAD.
    a = jnp.asarray(_A_NP)                                         # (4, 8, 64)
    gw_blocks = []
    for i in range(NUM_LAYERS):
        wcomb_i = jnp.concatenate(
            [params["backbone"][i] @ params["downsampler"][task][i] for task in TASKS],
            axis=1)                                                # (3, 32) cols (task, k)
        p_i = wcomb_i @ w1pack[i * N_TASKS * C_STAGE:(i + 1) * N_TASKS * C_STAGE]   # (3, 64)
        p_i = jnp.concatenate(
            [p_i, jnp.zeros((C_PAD - IN_CHANNELS, p_i.shape[1]), p_i.dtype)], axis=0)
        gw_i = jnp.einsum('qw,ch->cwqh', a[i], p_i).reshape(KSTAGE, QHID)            # (256, 512)
        gw_blocks.append(gw_i)
    gw = jnp.concatenate(gw_blocks, axis=0)                        # (1024, 512)

    # Wfold[(q,hid),(ch,x)] = W2pack[hid,ch] * U[x,q]              -> (512, 512)
    u = jnp.asarray(_U_NP)                                         # (64, 8)
    wfold = jnp.einsum('hc,xq->qhcx', w2pack, u).reshape(QHID, CHX)
    return gw, wfold


# ------------------------------------- forward pass -------------------------------------
def multitask_swin_forward(params, x_nchw):
    """MultiTaskSwin.forward (PER_TASK_DOWNSAMPLER=True, MTLORA disabled):
    one fused Pallas kernel; returns {task: NCHW logits at IMG_SIZE} like PyTorch."""
    B = x_nchw.shape[0]
    # Batch tile: 4 fills a v6e/v7x 256-wide MXU pass (M = Bt*64 = 256); fall back to divisors.
    bt = next(d for d in (4, 2, 1) if B % d == 0)
    n_tiles = B // bt
    bf = jnp.bfloat16

    gw, wfold = _pack_weights(params)
    l_np, lup_np = _batch_shuffle_matrices(bt)

    # NCHW -> rows (b, h), lanes (c_pad, w); channels padded 3->4 so lanes are a 128 multiple.
    x_pad = jnp.concatenate(
        [x_nchw, jnp.zeros((B, C_PAD - IN_CHANNELS, IMG_SIZE, IMG_SIZE), x_nchw.dtype)], axis=1)
    x2 = jnp.transpose(x_pad, (0, 2, 1, 3)).reshape(B * IMG_SIZE, C_PAD * IMG_SIZE).astype(bf)

    flops = 2 * n_tiles * (
        (NUM_LAYERS * bt * H0) * (bt * IMG_SIZE) * KSTAGE          # V = L @ X
        + NUM_LAYERS * (bt * H0) * KSTAGE * QHID                   # sum_i V_i @ GW_i
        + (bt * H0) * QHID * CHX                                   # t1 = h @ Wfold
        + (bt * IMG_SIZE) * (bt * H0) * CHX)                       # out = Lup @ t1
    bytes_accessed = int(x2.size * 2 + B * IMG_SIZE * CHX * 4
                         + (gw.size + wfold.size + l_np.size + lup_np.size) * 2)

    out_slab = pl.pallas_call(
        _mtl_swin_kernel,
        out_shape=jax.ShapeDtypeStruct((B * IMG_SIZE, CHX), jnp.float32),
        grid=(n_tiles,),
        in_specs=[
            pl.BlockSpec((bt * IMG_SIZE, C_PAD * IMG_SIZE), lambda b: (b, 0)),
            pl.BlockSpec((NUM_LAYERS * bt * H0, bt * IMG_SIZE), lambda b: (0, 0)),
            pl.BlockSpec((NUM_LAYERS * KSTAGE, QHID), lambda b: (0, 0)),
            pl.BlockSpec((QHID, CHX), lambda b: (0, 0)),
            pl.BlockSpec((bt * IMG_SIZE, bt * H0), lambda b: (0, 0)),
        ],
        out_specs=pl.BlockSpec((bt * IMG_SIZE, CHX), lambda b: (b, 0)),
        compiler_params=pltpu.CompilerParams(
            dimension_semantics=("parallel",)),     # batch tiles land on both TCs of a v7x chip
        cost_estimate=pl.CostEstimate(flops=flops, transcendentals=0,
                                      bytes_accessed=bytes_accessed),
    )(x2, jnp.asarray(l_np, bf), gw.astype(bf), wfold.astype(bf), jnp.asarray(lup_np, bf))

    # Lane-dense slab (B*64, (ch, x)) -> NCHW, split tasks (cheap XLA reshape/transpose).
    out = out_slab.reshape(B, IMG_SIZE, OUT_PAD, IMG_SIZE).transpose(0, 2, 1, 3)
    n_sem = NUM_OUTPUTS["semseg"]
    return {"semseg": out[:, :n_sem],
            "depth": out[:, n_sem:n_sem + NUM_OUTPUTS["depth"]]}


# --------------------------------- plain-JAX reference (unfused, f32) ----------------------------------
def _ref_interp(x_nhwc, out_hw):
    B, H, W, C = x_nhwc.shape
    if (out_hw[0], out_hw[1]) == (H, W):
        return x_nhwc
    wr = jnp.asarray(bilinear_matrix(out_hw[0], H))
    wc = jnp.asarray(bilinear_matrix(out_hw[1], W))
    return jnp.einsum("oh,bhwc,pw->bopc", wr, x_nhwc, wc)


def reference_forward(params, x_nchw):
    B = x_nchw.shape[0]
    x_nhwc = jnp.transpose(x_nchw, (0, 2, 3, 1))
    H = x_nhwc.shape[1]
    stages = []
    for i in range(NUM_LAYERS):
        r = INPUT_RES[i]
        f = H // r
        pooled = x_nhwc.reshape(B, r, f, r, f, IN_CHANNELS).mean(axis=(2, 4))
        stages.append(pooled @ params["backbone"][i])
    result = {}
    for task in TASKS:
        feats = [stages[i] @ params["downsampler"][task][i] for i in range(NUM_LAYERS)]
        ups = [feats[0]] + [_ref_interp(feats[i], (H0, H0)) for i in range(1, NUM_LAYERS)]
        cat = jnp.concatenate(ups, axis=-1)
        h = jnp.maximum(cat @ params["head"][task]["w1"], 0.0)
        o = h @ params["head"][task]["w2"]
        up = _ref_interp(o, (IMG_SIZE, IMG_SIZE))
        result[task] = jnp.transpose(up, (0, 3, 1, 2))
    return result


# --------------------------------------- main -------------------------------------------
if __name__ == "__main__":
    key = jax.random.PRNGKey(0)
    pkey, xkey = jax.random.split(key)
    params = init_params(pkey)

    x = jax.random.normal(xkey, (2, IN_CHANNELS, IMG_SIZE, IMG_SIZE), jnp.float32)

    fwd = jax.jit(multitask_swin_forward)
    out = fwd(params, x)
    out = jax.tree_util.tree_map(jax.block_until_ready, out)

    for task in TASKS:
        assert out[task].shape == (2, NUM_OUTPUTS[task], IMG_SIZE, IMG_SIZE), out[task].shape
        assert bool(jnp.isfinite(out[task]).all())

    ref = reference_forward(params, x)
    for task in TASKS:
        np.testing.assert_allclose(np.asarray(out[task]), np.asarray(ref[task]),
                                   rtol=2e-2, atol=5e-3)

    print("KERNEL_OK")
</pallas_src>

<mosaic_0001>
module attributes {stable_mosaic.version = 11 : i64} {
  func.func @_mtl_swin_kernel(%arg0: i32, %arg1: memref<128x256xbf16, #tpu.memory_space<vmem>>, %arg2: memref<64x128xbf16, #tpu.memory_space<vmem>>, %arg3: memref<1024x512xbf16, #tpu.memory_space<vmem>>, %arg4: memref<512x512xbf16, #tpu.memory_space<vmem>>, %arg5: memref<128x16xbf16, #tpu.memory_space<vmem>>, %arg6: memref<128x512xf32, #tpu.memory_space<vmem>>) attributes {dimension_semantics = [#tpu.dimension_semantics<parallel>], iteration_bounds = array<i64: 1>, scalar_prefetch = 0 : i64, scratch_operands = 0 : i64, tpu.core_type = #tpu.core_type<tc>, window_params = [{transform_indices = @transform_0, window_bounds = array<i64: 128, 256>}, {pipeline_mode = #tpu.pipeline_mode<synchronous>, transform_indices = @transform_1, window_bounds = array<i64: 64, 128>}, {pipeline_mode = #tpu.pipeline_mode<synchronous>, transform_indices = @transform_2, window_bounds = array<i64: 1024, 512>}, {pipeline_mode = #tpu.pipeline_mode<synchronous>, transform_indices = @transform_3, window_bounds = array<i64: 512, 512>}, {pipeline_mode = #tpu.pipeline_mode<synchronous>, transform_indices = @transform_4, window_bounds = array<i64: 128, 16>}, {transform_indices = @transform_5, window_bounds = array<i64: 128, 512>}]} {
    %c0 = arith.constant 0 : index
    %c0_0 = arith.constant 0 : index
    %0 = vector.load %arg2[%c0, %c0_0] : memref<64x128xbf16, #tpu.memory_space<vmem>>, vector<64x128xbf16>
    %c0_1 = arith.constant 0 : index
    %c0_2 = arith.constant 0 : index
    %1 = vector.load %arg1[%c0_1, %c0_2] : memref<128x256xbf16, #tpu.memory_space<vmem>>, vector<128x256xbf16>
    %cst = arith.constant dense<0.000000e+00> : vector<64x256xf32>
    %2 = tpu.matmul %0, %1, %cst {dimension_numbers = #tpu.dot_dimension_numbers<[1], [0], [0], [1], [0, 0, 1, 1], [], []>} : vector<64x128xbf16>, vector<128x256xbf16>, vector<64x256xf32> -> vector<64x256xf32>
    %3 = vector.extract_strided_slice %2 {offsets = [0, 0], sizes = [16, 256], strides = [1, 1]} : vector<64x256xf32> to vector<16x256xf32>
    %4 = arith.truncf %3 : vector<16x256xf32> to vector<16x256xbf16>
    %c0_3 = arith.constant 0 : index
    %c0_4 = arith.constant 0 : index
    %5 = vector.load %arg3[%c0_3, %c0_4] : memref<1024x512xbf16, #tpu.memory_space<vmem>>, vector<256x512xbf16>
    %cst_5 = arith.constant dense<0.000000e+00> : vector<16x512xf32>
    %6 = tpu.matmul %4, %5, %cst_5 {dimension_numbers = #tpu.dot_dimension_numbers<[1], [0], [0], [1], [0, 0, 1, 1], [], []>} : vector<16x256xbf16>, vector<256x512xbf16>, vector<16x512xf32> -> vector<16x512xf32>
    %7 = vector.extract_strided_slice %2 {offsets = [16, 0], sizes = [16, 256], strides = [1, 1]} : vector<64x256xf32> to vector<16x256xf32>
    %8 = arith.truncf %7 : vector<16x256xf32> to vector<16x256xbf16>
    %c256 = arith.constant 256 : index
    %c0_6 = arith.constant 0 : index
    %9 = vector.load %arg3[%c256, %c0_6] : memref<1024x512xbf16, #tpu.memory_space<vmem>>, vector<256x512xbf16>
    %cst_7 = arith.constant dense<0.000000e+00> : vector<16x512xf32>
    %10 = tpu.matmul %8, %9, %cst_7 {dimension_numbers = #tpu.dot_dimension_numbers<[1], [0], [0], [1], [0, 0, 1, 1], [], []>} : vector<16x256xbf16>, vector<256x512xbf16>, vector<16x512xf32> -> vector<16x512xf32>
    %11 = arith.addf %6, %10 : vector<16x512xf32>
    %12 = vector.extract_strided_slice %2 {offsets = [32, 0], sizes = [16, 256], strides = [1, 1]} : vector<64x256xf32> to vector<16x256xf32>
    %13 = arith.truncf %12 : vector<16x256xf32> to vector<16x256xbf16>
    %c512 = arith.constant 512 : index
    %c0_8 = arith.constant 0 : index
    %14 = vector.load %arg3[%c512, %c0_8] : memref<1024x512xbf16, #tpu.memory_space<vmem>>, vector<256x512xbf16>
    %cst_9 = arith.constant dense<0.000000e+00> : vector<16x512xf32>
    %15 = tpu.matmul %13, %14, %cst_9 {dimension_numbers = #tpu.dot_dimension_numbers<[1], [0], [0], [1], [0, 0, 1, 1], [], []>} : vector<16x256xbf16>, vector<256x512xbf16>, vector<16x512xf32> -> vector<16x512xf32>
    %16 = arith.addf %11, %15 : vector<16x512xf32>
    %17 = vector.extract_strided_slice %2 {offsets = [48, 0], sizes = [16, 256], strides = [1, 1]} : vector<64x256xf32> to vector<16x256xf32>
    %18 = arith.truncf %17 : vector<16x256xf32> to vector<16x256xbf16>
    %c768 = arith.constant 768 : index
    %c0_10 = arith.constant 0 : index
    %19 = vector.load %arg3[%c768, %c0_10] : memref<1024x512xbf16, #tpu.memory_space<vmem>>, vector<256x512xbf16>
    %cst_11 = arith.constant dense<0.000000e+00> : vector<16x512xf32>
    %20 = tpu.matmul %18, %19, %cst_11 {dimension_numbers = #tpu.dot_dimension_numbers<[1], [0], [0], [1], [0, 0, 1, 1], [], []>} : vector<16x256xbf16>, vector<256x512xbf16>, vector<16x512xf32> -> vector<16x512xf32>
    %21 = arith.addf %16, %20 : vector<16x512xf32>
    %cst_12 = arith.constant 0.000000e+00 : f32
    %22 = vector.broadcast %cst_12 : f32 to vector<16x512xf32>
    %23 = arith.maximumf %21, %22 : vector<16x512xf32>
    %24 = arith.truncf %23 : vector<16x512xf32> to vector<16x512xbf16>
    %c0_13 = arith.constant 0 : index
    %c0_14 = arith.constant 0 : index
    %25 = vector.load %arg4[%c0_13, %c0_14] : memref<512x512xbf16, #tpu.memory_space<vmem>>, vector<512x512xbf16>
    %cst_15 = arith.constant dense<0.000000e+00> : vector<16x512xf32>
    %26 = tpu.matmul %24, %25, %cst_15 {dimension_numbers = #tpu.dot_dimension_numbers<[1], [0], [0], [1], [0, 0, 1, 1], [], []>} : vector<16x512xbf16>, vector<512x512xbf16>, vector<16x512xf32> -> vector<16x512xf32>
    %c0_16 = arith.constant 0 : index
    %c0_17 = arith.constant 0 : index
    %27 = vector.load %arg5[%c0_16, %c0_17] : memref<128x16xbf16, #tpu.memory_space<vmem>>, vector<128x16xbf16>
    %28 = arith.truncf %26 : vector<16x512xf32> to vector<16x512xbf16>
    %cst_18 = arith.constant dense<0.000000e+00> : vector<128x512xf32>
    %29 = tpu.matmul %27, %28, %cst_18 {dimension_numbers = #tpu.dot_dimension_numbers<[1], [0], [0], [1], [0, 0, 1, 1], [], []>} : vector<128x16xbf16>, vector<16x512xbf16>, vector<128x512xf32> -> vector<128x512xf32>
    %c0_19 = arith.constant 0 : index
    %c0_20 = arith.constant 0 : index
    %30 = vector.load %arg6[%c0_19, %c0_20] : memref<128x512xf32, #tpu.memory_space<vmem>>, vector<128x512xf32>
    tpu.vector_store %arg6[%c0_19, %c0_20], %29 {strides = array<i32>} : memref<128x512xf32, #tpu.memory_space<vmem>>, vector<128x512xf32>,
    return
  }
  func.func @transform_0(%arg0: i32) -> (i32, i32) {
    %c0_i32 = arith.constant 0 : i32
    %c0_i32_0 = arith.constant 0 : i32
    return %arg0, %c0_i32 : i32, i32
  }
  func.func @transform_1(%arg0: i32) -> (i32, i32) {
    %c0_i32 = arith.constant 0 : i32
    %c0_i32_0 = arith.constant 0 : i32
    %c0_i32_1 = arith.constant 0 : i32
    return %c0_i32, %c0_i32_0 : i32, i32
  }
  func.func @transform_2(%arg0: i32) -> (i32, i32) {
    %c0_i32 = arith.constant 0 : i32
    %c0_i32_0 = arith.constant 0 : i32
    %c0_i32_1 = arith.constant 0 : i32
    return %c0_i32, %c0_i32_0 : i32, i32
  }
  func.func @transform_3(%arg0: i32) -> (i32, i32) {
    %c0_i32 = arith.constant 0 : i32
    %c0_i32_0 = arith.constant 0 : i32
    %c0_i32_1 = arith.constant 0 : i32
    return %c0_i32, %c0_i32_0 : i32, i32
  }
  func.func @transform_4(%arg0: i32) -> (i32, i32) {
    %c0_i32 = arith.constant 0 : i32
    %c0_i32_0 = arith.constant 0 : i32
    %c0_i32_1 = arith.constant 0 : i32
    return %c0_i32, %c0_i32_0 : i32, i32
  }
  func.func @transform_5(%arg0: i32) -> (i32, i32) {
    %c0_i32 = arith.constant 0 : i32
    %c0_i32_0 = arith.constant 0 : i32
    return %arg0, %c0_i32 : i32, i32
  }
}

</mosaic_0001>

<llo_original>
// kernel: multitask_swin_forward.1
$region0: #{multitask_swin_forward.1}
  #allocation0 [shape = 'u32[]', space=smem, size = 0x4, offset = 0x4, fixed_abs, tag = 'smem constant byte address 0x4 - core index']
  #allocation1 [shape = 'u32[144,128]{1,0:T(1,128)}', space=vmem, size = 0x12000, scoped, tag = 'internal scratch']
  %s0 = inlined_call_operand.vmem [shape: bf16[128,256], index: 0, kind: input, shape index: {}]
  %s1 = inlined_call_operand.vmem [shape: bf16[64,128], index: 1, kind: input, shape index: {}]
  %s2 = inlined_call_operand.vmem [shape: bf16[1024,512], index: 2, kind: input, shape index: {}]
  %s3 = inlined_call_operand.vmem [shape: bf16[512,512], index: 3, kind: input, shape index: {}]
  %s4 = inlined_call_operand.vmem [shape: bf16[128,16], index: 4, kind: input, shape index: {}]
  %s5 = inlined_call_operand.vmem [shape: f32[128,512], index: 5, kind: output, shape index: {}]
  %s6 = sld [smem:[#allocation0]]
  $region30: #{multitask_swin_forward.1} parent=0
    _
  %s8 = ssub.s32 1, %s6
  %s9 = scalar_select 0, %s8, %s6
  // Predicated region
  $region2: #{multitask_swin_forward.1} parent=0 // pred_check
    _
  $region3: #{multitask_swin_forward.1} parent=0 // pred_check_branch
    %11 = sbr.rel (0) target = $region5
  $region4: #{multitask_swin_forward.1} parent=0 // pred_region
    _
  $region5: #{multitask_swin_forward.1} parent=0 // pred_fallthru
    _
  // Predicated region
  $region6: #{multitask_swin_forward.1} parent=0 // pred_check
    _
  $region7: #{multitask_swin_forward.1} parent=0 // pred_check_branch
    %13 = sbr.rel (0) target = $region9
  $region8: #{multitask_swin_forward.1} parent=0 // pred_region
    _
  $region9: #{multitask_swin_forward.1} parent=0 // pred_fallthru
    _
  // Predicated region
  $region10: #{multitask_swin_forward.1} parent=0 // pred_check
    _
  $region11: #{multitask_swin_forward.1} parent=0 // pred_check_branch
    %15 = sbr.rel (0) target = $region13
  $region12: #{multitask_swin_forward.1} parent=0 // pred_region
    _
  $region13: #{multitask_swin_forward.1} parent=0 // pred_fallthru
    _
  // Predicated region
  $region14: #{multitask_swin_forward.1} parent=0 // pred_check
    _
  $region15: #{multitask_swin_forward.1} parent=0 // pred_check_branch
    %17 = sbr.rel (0) target = $region17
  $region16: #{multitask_swin_forward.1} parent=0 // pred_region
    _
  $region17: #{multitask_swin_forward.1} parent=0 // pred_fallthru
    _
  // Predicated region
  $region18: #{multitask_swin_forward.1} parent=0 // pred_check
    _
  $region19: #{multitask_swin_forward.1} parent=0 // pred_check_branch
    %19 = sbr.rel (0) target = $region21
  $region20: #{multitask_swin_forward.1} parent=0 // pred_region
    _
  $region21: #{multitask_swin_forward.1} parent=0 // pred_fallthru
    _
  %v21 = vld [vmem:[%s1] sm:$0xf]
  %v22 = vld [vmem:[%s1 + $0x4] sm:$0xf]
  %v23 = vld [vmem:[%s1 + $0x8] sm:$0xf]
  %v24 = vld [vmem:[%s1 + $0xc] sm:$0xf]
  %v25 = vld [vmem:[%s1 + $0x10] sm:$0xf]
  %v26 = vld [vmem:[%s1 + $0x14] sm:$0xf]
  %v27 = vld [vmem:[%s1 + $0x18] sm:$0xf]
  %v28 = vld [vmem:[%s1 + $0x1c] sm:$0xf]
  %v29 = vld [vmem:[%s0] sm:$0xff]
  %v30 = vld [vmem:[%s0 + $0x8] sm:$0xff]
  %v31 = vld [vmem:[%s0 + $0x10] sm:$0xff]
  %v32 = vld [vmem:[%s0 + $0x18] sm:$0xff]
  %v33 = vld [vmem:[%s0 + $0x20] sm:$0xff]
  %v34 = vld [vmem:[%s0 + $0x28] sm:$0xff]
  %v35 = vld [vmem:[%s0 + $0x30] sm:$0xff]
  %v36 = vld [vmem:[%s0 + $0x38] sm:$0xff]
  %v37 = vld [vmem:[%s0 + $0x40] sm:$0xff]
  %v38 = vld [vmem:[%s0 + $0x48] sm:$0xff]
  %v39 = vld [vmem:[%s0 + $0x50] sm:$0xff]
  %v40 = vld [vmem:[%s0 + $0x58] sm:$0xff]
  %v41 = vld [vmem:[%s0 + $0x60] sm:$0xff]
  %v42 = vld [vmem:[%s0 + $0x68] sm:$0xff]
  %v43 = vld [vmem:[%s0 + $0x70] sm:$0xff]
  %v44 = vld [vmem:[%s0 + $0x78] sm:$0xff]
  %v53 = vunpack.c.l.b16 %v21
  %v54 = vunpack.c.l.b16 %v22
  %v55 = vunpack.c.l.b16 %v23
  %v56 = vunpack.c.l.b16 %v24
  %v57 = vunpack.c.l.b16 %v25
  %v58 = vunpack.c.l.b16 %v26
  %v59 = vunpack.c.l.b16 %v27
  %v60 = vunpack.c.l.b16 %v28
  %v61 = vpack.c.b16 %v54, %v53
  %v62 = vpack.c.b16 %v56, %v55
  %v63 = vpack.c.b16 %v58, %v57
  %v64 = vpack.c.b16 %v60, %v59
  %v85 = vunpack.c.l.b16 %v29
  %v86 = vunpack.c.h.b16 %v29
  %v87 = vunpack.c.l.b16 %v30
  %v88 = vunpack.c.h.b16 %v30
  %v89 = vunpack.c.l.b16 %v31
  %v90 = vunpack.c.h.b16 %v31
  %v91 = vunpack.c.l.b16 %v32
  %v92 = vunpack.c.h.b16 %v32
  %v93 = vunpack.c.l.b16 %v33
  %v94 = vunpack.c.h.b16 %v33
  %v95 = vunpack.c.l.b16 %v34
  %v96 = vunpack.c.h.b16 %v34
  %v97 = vunpack.c.l.b16 %v35
  %v98 = vunpack.c.h.b16 %v35
  %v99 = vunpack.c.l.b16 %v36
  %v100 = vunpack.c.h.b16 %v36
  %v101 = vunpack.c.l.b16 %v37
  %v102 = vunpack.c.h.b16 %v37
  %v103 = vunpack.c.l.b16 %v38
  %v104 = vunpack.c.h.b16 %v38
  %v105 = vunpack.c.l.b16 %v39
  %v106 = vunpack.c.h.b16 %v39
  %v107 = vunpack.c.l.b16 %v40
  %v108 = vunpack.c.h.b16 %v40
  %v109 = vunpack.c.l.b16 %v41
  %v110 = vunpack.c.h.b16 %v41
  %v111 = vunpack.c.l.b16 %v42
  %v112 = vunpack.c.h.b16 %v42
  %v113 = vunpack.c.l.b16 %v43
  %v114 = vunpack.c.h.b16 %v43
  %v115 = vunpack.c.l.b16 %v44
  %v116 = vunpack.c.h.b16 %v44
  %v117 = vpack.c.b16 %v87, %v85
  %v118 = vpack.c.b16 %v88, %v86
  %v119 = vpack.c.b16 %v91, %v89
  %v120 = vpack.c.b16 %v92, %v90
  %v121 = vpack.c.b16 %v95, %v93
  %v122 = vpack.c.b16 %v96, %v94
  %v123 = vpack.c.b16 %v99, %v97
  %v124 = vpack.c.b16 %v100, %v98
  %v125 = vpack.c.b16 %v103, %v101
  %v126 = vpack.c.b16 %v104, %v102
  %v127 = vpack.c.b16 %v107, %v105
  %v128 = vpack.c.b16 %v108, %v106
  %v129 = vpack.c.b16 %v111, %v109
  %v130 = vpack.c.b16 %v112, %v110
  %v131 = vpack.c.b16 %v115, %v113
  %v132 = vpack.c.b16 %v116, %v114
  %149 = vmatprep.subr.bf16.mxu0 %v132
  %150 = vmatpush1.bf16.msra.mxu0 %v131
  %151 = vmatprep.subr.bf16.mxu0 %v130
  %152 = vmatpush1.bf16.msra.mxu0 %v129
  %153 = vmatprep.subr.bf16.mxu0 %v128
  %154 = vmatpush1.bf16.msra.mxu0 %v127
  %155 = vmatprep.subr.bf16.mxu0 %v126
  %156 = vmatpush1.bf16.msra.mxu0 %v125
  %157 = vmatprep.subr.bf16.mxu0 %v124
  %158 = vmatpush1.bf16.msra.mxu0 %v123
  %159 = vmatprep.subr.bf16.mxu0 %v122
  %160 = vmatpush1.bf16.msra.mxu0 %v121
  %161 = vmatprep.subr.bf16.mxu0 %v120
  %162 = vmatpush1.bf16.msra.mxu0 %v119
  %163 = vmatprep.subr.bf16.mxu0 %v118
  %164 = vmatpush1.bf16.msra.mxu0 %v117
  %165 = vmatprep.subr.bf16.mxu0 0
  %166 = vmatpush2.bf16.msra.mxu0 0
  %167 = vmatprep.subr.bf16.mxu0 0
  %168 = vmatpush2.bf16.msra.mxu0 0
  %169 = vmatprep.subr.bf16.mxu0 0
  %170 = vmatpush2.bf16.msra.mxu0 0
  %171 = vmatprep.subr.bf16.mxu0 0
  %172 = vmatpush2.bf16.msra.mxu0 0
  %173 = vmatprep.subr.bf16.mxu0 0
  %174 = vmatpush2.bf16.msra.mxu0 0
  %175 = vmatprep.subr.bf16.mxu0 0
  %176 = vmatpush2.bf16.msra.mxu0 0
  %177 = vmatprep.subr.bf16.mxu0 0
  %178 = vmatpush2.bf16.msra.mxu0 0
  %179 = vmatprep.subr.bf16.mxu0 0
  %180 = vmatpush2.bf16.msra.mxu0 0
  %181 = vmatprep.mubr.bf16.mxu0 0
  %182 = vmatmul.mubr.bf16.gmra.mxu0 %v61
  %v183 = vpop.f32.mrf.mxu0
  %v184 = vadd.f32 0.0, %v183
  %v185 = vpop.f32.mrf.mxu0
  %v186 = vadd.f32 0.0, %v185
  %v187 = vpop.f32.mrf.mxu0
  %v188 = vadd.f32 0.0, %v187
  %v189 = vpop.f32.mrf.mxu0
  %v190 = vadd.f32 0.0, %v189
  %191 = vmatprep.mubr.bf16.mxu0 0
  %192 = vmatmul.mubr.bf16.gmra.mxu0 %v62
  %v193 = vpop.f32.mrf.mxu0
  %v194 = vadd.f32 0.0, %v193
  %v195 = vpop.f32.mrf.mxu0
  %v196 = vadd.f32 0.0, %v195
  %v197 = vpop.f32.mrf.mxu0
  %v198 = vadd.f32 0.0, %v197
  %v199 = vpop.f32.mrf.mxu0
  %v200 = vadd.f32 0.0, %v199
  %201 = vmatprep.mubr.bf16.mxu0 0
  %202 = vmatmul.mubr.bf16.gmra.mxu0 %v63
  %v203 = vpop.f32.mrf.mxu0
  %v204 = vadd.f32 0.0, %v203
  %v205 = vpop.f32.mrf.mxu0
  %v206 = vadd.f32 0.0, %v205
  %v207 = vpop.f32.mrf.mxu0
  %v208 = vadd.f32 0.0, %v207
  %v209 = vpop.f32.mrf.mxu0
  %v210 = vadd.f32 0.0, %v209
  %211 = vmatprep.mubr.bf16.mxu0 0
  %212 = vmatmul.mubr.bf16.gmra.mxu0 %v64
  %v213 = vpop.f32.mrf.mxu0
  %v214 = vadd.f32 0.0, %v213
  %v215 = vpop.f32.mrf.mxu0
  %v216 = vadd.f32 0.0, %v215
  %v217 = vpop.f32.mrf.mxu0
  %v218 = vadd.f32 0.0, %v217
  %v219 = vpop.f32.mrf.mxu0
  %v220 = vadd.f32 0.0, %v219
  %221 = vdwg.mxu0
  %v222 = vpack.c.bf16 %v188, %v184
  %v223 = vpack.c.bf16 %v190, %v186
  %v224 = vld [vmem:[%s2] sm:$0xff]
  %v225 = vld [vmem:[%s2 + $0x8] sm:$0xff]
  %v226 = vld [vmem:[%s2 + $0x10] sm:$0xff]
  %v227 = vld [vmem:[%s2 + $0x18] sm:$0xff]
  %v228 = vld [vmem:[%s2 + $0x20] sm:$0xff]
  %v229 = vld [vmem:[%s2 + $0x28] sm:$0xff]
  %v230 = vld [vmem:[%s2 + $0x30] sm:$0xff]
  %v231 = vld [vmem:[%s2 + $0x38] sm:$0xff]
  %v232 = vld [vmem:[%s2 + $0x40] sm:$0xff]
  %v233 = vld [vmem:[%s2 + $0x48] sm:$0xff]
  %v234 = vld [vmem:[%s2 + $0x50] sm:$0xff]
  %v235 = vld [vmem:[%s2 + $0x58] sm:$0xff]
  %v236 = vld [vmem:[%s2 + $0x60] sm:$0xff]
  %v237 = vld [vmem:[%s2 + $0x68] sm:$0xff]
  %v238 = vld [vmem:[%s2 + $0x70] sm:$0xff]
  %v239 = vld [vmem:[%s2 + $0x78] sm:$0xff]
  %v240 = vld [vmem:[%s2 + $0x80] sm:$0xff]
  %v241 = vld [vmem:[%s2 + $0x88] sm:$0xff]
  %v242 = vld [vmem:[%s2 + $0x90] sm:$0xff]
  %v243 = vld [vmem:[%s2 + $0x98] sm:$0xff]
  %v244 = vld [vmem:[%s2 + $0xa0] sm:$0xff]
  %v245 = vld [vmem:[%s2 + $0xa8] sm:$0xff]
  %v246 = vld [vmem:[%s2 + $0xb0] sm:$0xff]
  %v247 = vld [vmem:[%s2 + $0xb8] sm:$0xff]
  %v248 = vld [vmem:[%s2 + $0xc0] sm:$0xff]
  %v249 = vld [vmem:[%s2 + $0xc8] sm:$0xff]
  %v250 = vld [vmem:[%s2 + $0xd0] sm:$0xff]
  %v251 = vld [vmem:[%s2 + $0xd8] sm:$0xff]
  %v252 = vld [vmem:[%s2 + $0xe0] sm:$0xff]
  %v253 = vld [vmem:[%s2 + $0xe8] sm:$0xff]
  %v254 = vld [vmem:[%s2 + $0xf0] sm:$0xff]
  %v255 = vld [vmem:[%s2 + $0xf8] sm:$0xff]
  %v256 = vld [vmem:[%s2 + $0x100] sm:$0xff]
  %v257 = vld [vmem:[%s2 + $0x108] sm:$0xff]
  %v258 = vld [vmem:[%s2 + $0x110] sm:$0xff]
  %v259 = vld [vmem:[%s2 + $0x118] sm:$0xff]
  %v260 = vld [vmem:[%s2 + $0x120] sm:$0xff]
  %v261 = vld [vmem:[%s2 + $0x128] sm:$0xff]
  %v262 = vld [vmem:[%s2 + $0x130] sm:$0xff]
  %v263 = vld [vmem:[%s2 + $0x138] sm:$0xff]
  %v264 = vld [vmem:[%s2 + $0x140] sm:$0xff]
  %v265 = vld [vmem:[%s2 + $0x148] sm:$0xff]
  %v266 = vld [vmem:[%s2 + $0x150] sm:$0xff]
  %v267 = vld [vmem:[%s2 + $0x158] sm:$0xff]
  %v268 = vld [vmem:[%s2 + $0x160] sm:$0xff]
  %v269 = vld [vmem:[%s2 + $0x168] sm:$0xff]
  %v270 = vld [vmem:[%s2 + $0x170] sm:$0xff]
  %v271 = vld [vmem:[%s2 + $0x178] sm:$0xff]
  %v272 = vld [vmem:[%s2 + $0x180] sm:$0xff]
  %v273 = vld [vmem:[%s2 + $0x188] sm:$0xff]
  %v274 = vld [vmem:[%s2 + $0x190] sm:$0xff]
  %v275 = vld [vmem:[%s2 + $0x198] sm:$0xff]
  %v276 = vld [vmem:[%s2 + $0x1a0] sm:$0xff]
  %v277 = vld [vmem:[%s2 + $0x1a8] sm:$0xff]
  %v278 = vld [vmem:[%s2 + $0x1b0] sm:$0xff]
  %v279 = vld [vmem:[%s2 + $0x1b8] sm:$0xff]
  %v280 = vld [vmem:[%s2 + $0x1c0] sm:$0xff]
  %v281 = vld [vmem:[%s2 + $0x1c8] sm:$0xff]
  %v282 = vld [vmem:[%s2 + $0x1d0] sm:$0xff]
  %v283 = vld [vmem:[%s2 + $0x1d8] sm:$0xff]
  %v284 = vld [vmem:[%s2 + $0x1e0] sm:$0xff]
  %v285 = vld [vmem:[%s2 + $0x1e8] sm:$0xff]
  %v286 = vld [vmem:[%s2 + $0x1f0] sm:$0xff]
  %v287 = vld [vmem:[%s2 + $0x1f8] sm:$0xff]
  %v288 = vpack.c.bf16 %v198, %v194
  %v289 = vpack.c.bf16 %v200, %v196
  %v290 = vld [vmem:[%s2 + $0x200] sm:$0xff]
  %v291 = vld [vmem:[%s2 + $0x208] sm:$0xff]
  %v292 = vld [vmem:[%s2 + $0x210] sm:$0xff]
  %v293 = vld [vmem:[%s2 + $0x218] sm:$0xff]
  %v294 = vld [vmem:[%s2 + $0x220] sm:$0xff]
  %v295 = vld [vmem:[%s2 + $0x228] sm:$0xff]
  %v296 = vld [vmem:[%s2 + $0x230] sm:$0xff]
  %v297 = vld [vmem:[%s2 + $0x238] sm:$0xff]
  %v298 = vld [vmem:[%s2 + $0x240] sm:$0xff]
  %v299 = vld [vmem:[%s2 + $0x248] sm:$0xff]
  %v300 = vld [vmem:[%s2 + $0x250] sm:$0xff]
  %v301 = vld [vmem:[%s2 + $0x258] sm:$0xff]
  %v302 = vld [vmem:[%s2 + $0x260] sm:$0xff]
  %v303 = vld [vmem:[%s2 + $0x268] sm:$0xff]
  %v304 = vld [vmem:[%s2 + $0x270] sm:$0xff]
  %v305 = vld [vmem:[%s2 + $0x278] sm:$0xff]
  %v306 = vld [vmem:[%s2 + $0x280] sm:$0xff]
  %v307 = vld [vmem:[%s2 + $0x288] sm:$0xff]
  %v308 = vld [vmem:[%s2 + $0x290] sm:$0xff]
  %v309 = vld [vmem:[%s2 + $0x298] sm:$0xff]
  %v310 = vld [vmem:[%s2 + $0x2a0] sm:$0xff]
  %v311 = vld [vmem:[%s2 + $0x2a8] sm:$0xff]
  %v312 = vld [vmem:[%s2 + $0x2b0] sm:$0xff]
  %v313 = vld [vmem:[%s2 + $0x2b8] sm:$0xff]
  %v314 = vld [vmem:[%s2 + $0x2c0] sm:$0xff]
  %v315 = vld [vmem:[%s2 + $0x2c8] sm:$0xff]
  %v316 = vld [vmem:[%s2 + $0x2d0] sm:$0xff]
  %v317 = vld [vmem:[%s2 + $0x2d8] sm:$0xff]
  %v318 = vld [vmem:[%s2 + $0x2e0] sm:$0xff]
  %v319 = vld [vmem:[%s2 + $0x2e8] sm:$0xff]
  %v320 = vld [vmem:[%s2 + $0x2f0] sm:$0xff]
  %v321 = vld [vmem:[%s2 + $0x2f8] sm:$0xff]
  %v322 = vld [vmem:[%s2 + $0x300] sm:$0xff]
  %v323 = vld [vmem:[%s2 + $0x308] sm:$0xff]
  %v324 = vld [vmem:[%s2 + $0x310] sm:$0xff]
  %v325 = vld [vmem:[%s2 + $0x318] sm:$0xff]
  %v326 = vld [vmem:[%s2 + $0x320] sm:$0xff]
  %v327 = vld [vmem:[%s2 + $0x328] sm:$0xff]
  %v328 = vld [vmem:[%s2 + $0x330] sm:$0xff]
  %v329 = vld [vmem:[%s2 + $0x338] sm:$0xff]
  %v330 = vld [vmem:[%s2 + $0x340] sm:$0xff]
  %v331 = vld [vmem:[%s2 + $0x348] sm:$0xff]
  %v332 = vld [vmem:[%s2 + $0x350] sm:$0xff]
  %v333 = vld [vmem:[%s2 + $0x358] sm:$0xff]
  %v334 = vld [vmem:[%s2 + $0x360] sm:$0xff]
  %v335 = vld [vmem:[%s2 + $0x368] sm:$0xff]
  %v336 = vld [vmem:[%s2 + $0x370] sm:$0xff]
  %v337 = vld [vmem:[%s2 + $0x378] sm:$0xff]
  %v338 = vld [vmem:[%s2 + $0x380] sm:$0xff]
  %v339 = vld [vmem:[%s2 + $0x388] sm:$0xff]
  %v340 = vld [vmem:[%s2 + $0x390] sm:$0xff]
  %v341 = vld [vmem:[%s2 + $0x398] sm:$0xff]
  %v342 = vld [vmem:[%s2 + $0x3a0] sm:$0xff]
  %v343 = vld [vmem:[%s2 + $0x3a8] sm:$0xff]
  %v344 = vld [vmem:[%s2 + $0x3b0] sm:$0xff]
  %v345 = vld [vmem:[%s2 + $0x3b8] sm:$0xff]
  %v346 = vld [vmem:[%s2 + $0x3c0] sm:$0xff]
  %v347 = vld [vmem:[%s2 + $0x3c8] sm:$0xff]
  %v348 = vld [vmem:[%s2 + $0x3d0] sm:$0xff]
  %v349 = vld [vmem:[%s2 + $0x3d8] sm:$0xff]
  %v350 = vld [vmem:[%s2 + $0x3e0] sm:$0xff]
  %v351 = vld [vmem:[%s2 + $0x3e8] sm:$0xff]
  %v352 = vld [vmem:[%s2 + $0x3f0] sm:$0xff]
  %v353 = vld [vmem:[%s2 + $0x3f8] sm:$0xff]
  %v418 = vunpack.c.l.b16 %v290
  %v419 = vunpack.c.h.b16 %v290
  %v420 = vunpack.c.l.b16 %v291
  %v421 = vunpack.c.h.b16 %v291
  %v422 = vunpack.c.l.b16 %v292
  %v423 = vunpack.c.h.b16 %v292
  %v424 = vunpack.c.l.b16 %v293
  %v425 = vunpack.c.h.b16 %v293
  %v426 = vunpack.c.l.b16 %v294
  %v427 = vunpack.c.h.b16 %v294
  %v428 = vunpack.c.l.b16 %v295
  %v429 = vunpack.c.h.b16 %v295
  %v430 = vunpack.c.l.b16 %v296
  %v431 = vunpack.c.h.b16 %v296
  %v432 = vunpack.c.l.b16 %v297
  %v433 = vunpack.c.h.b16 %v297
  %v434 = vunpack.c.l.b16 %v298
  %v435 = vunpack.c.h.b16 %v298
  %v436 = vunpack.c.l.b16 %v299
  %v437 = vunpack.c.h.b16 %v299
  %v438 = vunpack.c.l.b16 %v300
  %v439 = vunpack.c.h.b16 %v300
  %v440 = vunpack.c.l.b16 %v301
  %v441 = vunpack.c.h.b16 %v301
  %v442 = vunpack.c.l.b16 %v302
  %v443 = vunpack.c.h.b16 %v302
  %v444 = vunpack.c.l.b16 %v303
  %v445 = vunpack.c.h.b16 %v303
  %v446 = vunpack.c.l.b16 %v304
  %v447 = vunpack.c.h.b16 %v304
  %v448 = vunpack.c.l.b16 %v305
  %v449 = vunpack.c.h.b16 %v305
  %v450 = vunpack.c.l.b16 %v306
  %v451 = vunpack.c.h.b16 %v306
  %v452 = vunpack.c.l.b16 %v307
  %v453 = vunpack.c.h.b16 %v307
  %v454 = vunpack.c.l.b16 %v308
  %v455 = vunpack.c.h.b16 %v308
  %v456 = vunpack.c.l.b16 %v309
  %v457 = vunpack.c.h.b16 %v309
  %v458 = vunpack.c.l.b16 %v310
  %v459 = vunpack.c.h.b16 %v310
  %v460 = vunpack.c.l.b16 %v311
  %v461 = vunpack.c.h.b16 %v311
  %v462 = vunpack.c.l.b16 %v312
  %v463 = vunpack.c.h.b16 %v312
  %v464 = vunpack.c.l.b16 %v313
  %v465 = vunpack.c.h.b16 %v313
  %v466 = vunpack.c.l.b16 %v314
  %v467 = vunpack.c.h.b16 %v314
  %v468 = vunpack.c.l.b16 %v315
  %v469 = vunpack.c.h.b16 %v315
  %v470 = vunpack.c.l.b16 %v316
  %v471 = vunpack.c.h.b16 %v316
  %v472 = vunpack.c.l.b16 %v317
  %v473 = vunpack.c.h.b16 %v317
  %v474 = vunpack.c.l.b16 %v318
  %v475 = vunpack.c.h.b16 %v318
  %v476 = vunpack.c.l.b16 %v319
  %v477 = vunpack.c.h.b16 %v319
  %v478 = vunpack.c.l.b16 %v320
  %v479 = vunpack.c.h.b16 %v320
  %v480 = vunpack.c.l.b16 %v321
  %v481 = vunpack.c.h.b16 %v321
  %v482 = vunpack.c.l.b16 %v322
  %v483 = vunpack.c.h.b16 %v322
  %v484 = vunpack.c.l.b16 %v323
  %v485 = vunpack.c.h.b16 %v323
  %v486 = vunpack.c.l.b16 %v324
  %v487 = vunpack.c.h.b16 %v324
  %v488 = vunpack.c.l.b16 %v325
  %v489 = vunpack.c.h.b16 %v325
  %v490 = vunpack.c.l.b16 %v326
  %v491 = vunpack.c.h.b16 %v326
  %v492 = vunpack.c.l.b16 %v327
  %v493 = vunpack.c.h.b16 %v327
  %v494 = vunpack.c.l.b16 %v328
  %v495 = vunpack.c.h.b16 %v328
  %v496 = vunpack.c.l.b16 %v329
  %v497 = vunpack.c.h.b16 %v329
  %v498 = vunpack.c.l.b16 %v330
  %v499 = vunpack.c.h.b16 %v330
  %v500 = vunpack.c.l.b16 %v331
  %v501 = vunpack.c.h.b16 %v331
  %v502 = vunpack.c.l.b16 %v332
  %v503 = vunpack.c.h.b16 %v332
  %v504 = vunpack.c.l.b16 %v333
  %v505 = vunpack.c.h.b16 %v333
  %v506 = vunpack.c.l.b16 %v334
  %v507 = vunpack.c.h.b16 %v334
  %v508 = vunpack.c.l.b16 %v335
  %v509 = vunpack.c.h.b16 %v335
  %v510 = vunpack.c.l.b16 %v336
  %v511 = vunpack.c.h.b16 %v336
  %v512 = vunpack.c.l.b16 %v337
  %v513 = vunpack.c.h.b16 %v337
  %v514 = vunpack.c.l.b16 %v338
  %v515 = vunpack.c.h.b16 %v338
  %v516 = vunpack.c.l.b16 %v339
  %v517 = vunpack.c.h.b16 %v339
  %v518 = vunpack.c.l.b16 %v340
  %v519 = vunpack.c.h.b16 %v340
  %v520 = vunpack.c.l.b16 %v341
  %v521 = vunpack.c.h.b16 %v341
  %v522 = vunpack.c.l.b16 %v342
  %v523 = vunpack.c.h.b16 %v342
  %v524 = vunpack.c.l.b16 %v343
  %v525 = vunpack.c.h.b16 %v343
  %v526 = vunpack.c.l.b16 %v344
  %v527 = vunpack.c.h.b16 %v344
  %v528 = vunpack.c.l.b16 %v345
  %v529 = vunpack.c.h.b16 %v345
  %v530 = vunpack.c.l.b16 %v346
  %v531 = vunpack.c.h.b16 %v346
  %v532 = vunpack.c.l.b16 %v347
  %v533 = vunpack.c.h.b16 %v347
  %v534 = vunpack.c.l.b16 %v348
  %v535 = vunpack.c.h.b16 %v348
  %v536 = vunpack.c.l.b16 %v349
  %v537 = vunpack.c.h.b16 %v349
  %v538 = vunpack.c.l.b16 %v350
  %v539 = vunpack.c.h.b16 %v350
  %v540 = vunpack.c.l.b16 %v351
  %v541 = vunpack.c.h.b16 %v351
  %v542 = vunpack.c.l.b16 %v352
  %v543 = vunpack.c.h.b16 %v352
  %v544 = vunpack.c.l.b16 %v353
  %v545 = vunpack.c.h.b16 %v353
  %v546 = vpack.c.b16 %v422, %v418
  %v547 = vpack.c.b16 %v423, %v419
  %v548 = vpack.c.b16 %v424, %v420
  %v549 = vpack.c.b16 %v425, %v421
  %v550 = vpack.c.b16 %v430, %v426
  %v551 = vpack.c.b16 %v431, %v427
  %v552 = vpack.c.b16 %v432, %v428
  %v553 = vpack.c.b16 %v433, %v429
  %v554 = vpack.c.b16 %v438, %v434
  %v555 = vpack.c.b16 %v439, %v435
  %v556 = vpack.c.b16 %v440, %v436
  %v557 = vpack.c.b16 %v441, %v437
  %v558 = vpack.c.b16 %v446, %v442
  %v559 = vpack.c.b16 %v447, %v443
  %v560 = vpack.c.b16 %v448, %v444
  %v561 = vpack.c.b16 %v449, %v445
  %v562 = vpack.c.b16 %v454, %v450
  %v563 = vpack.c.b16 %v455, %v451
  %v564 = vpack.c.b16 %v456, %v452
  %v565 = vpack.c.b16 %v457, %v453
  %v566 = vpack.c.b16 %v462, %v458
  %v567 = vpack.c.b16 %v463, %v459
  %v568 = vpack.c.b16 %v464, %v460
  %v569 = vpack.c.b16 %v465, %v461
  %v570 = vpack.c.b16 %v470, %v466
  %v571 = vpack.c.b16 %v471, %v467
  %v572 = vpack.c.b16 %v472, %v468
  %v573 = vpack.c.b16 %v473, %v469
  %v574 = vpack.c.b16 %v478, %v474
  %v575 = vpack.c.b16 %v479, %v475
  %v576 = vpack.c.b16 %v480, %v476
  %v577 = vpack.c.b16 %v481, %v477
  %v578 = vpack.c.b16 %v486, %v482
  %v579 = vpack.c.b16 %v487, %v483
  %v580 = vpack.c.b16 %v488, %v484
  %v581 = vpack.c.b16 %v489, %v485
  %v582 = vpack.c.b16 %v494, %v490
  %v583 = vpack.c.b16 %v495, %v491
  %v584 = vpack.c.b16 %v496, %v492
  %v585 = vpack.c.b16 %v497, %v493
  %v586 = vpack.c.b16 %v502, %v498
  %v587 = vpack.c.b16 %v503, %v499
  %v588 = vpack.c.b16 %v504, %v500
  %v589 = vpack.c.b16 %v505, %v501
  %v590 = vpack.c.b16 %v510, %v506
  %v591 = vpack.c.b16 %v511, %v507
  %v592 = vpack.c.b16 %v512, %v508
  %v593 = vpack.c.b16 %v513, %v509
  %v594 = vpack.c.b16 %v518, %v514
  %v595 = vpack.c.b16 %v519, %v515
  %v596 = vpack.c.b16 %v520, %v516
  %v597 = vpack.c.b16 %v521, %v517
  %v598 = vpack.c.b16 %v526, %v522
  %v599 = vpack.c.b16 %v527, %v523
  %v600 = vpack.c.b16 %v528, %v524
  %v601 = vpack.c.b16 %v529, %v525
  %v602 = vpack.c.b16 %v534, %v530
  %v603 = vpack.c.b16 %v535, %v531
  %v604 = vpack.c.b16 %v536, %v532
  %v605 = vpack.c.b16 %v537, %v533
  %v606 = vpack.c.b16 %v542, %v538
  %v607 = vpack.c.b16 %v543, %v539
  %v608 = vpack.c.b16 %v544, %v540
  %v609 = vpack.c.b16 %v545, %v541
  %674 = vmatprep.subr.bf16.mxu0 %v575
  %675 = vmatpush1.bf16.msra.mxu0 %v574
  %676 = vmatprep.subr.bf16.mxu0 %v571
  %677 = vmatpush1.bf16.msra.mxu0 %v570
  %678 = vmatprep.subr.bf16.mxu0 %v567
  %679 = vmatpush1.bf16.msra.mxu0 %v566
  %680 = vmatprep.subr.bf16.mxu0 %v563
  %681 = vmatpush1.bf16.msra.mxu0 %v562
  %682 = vmatprep.subr.bf16.mxu0 %v559
  %683 = vmatpush1.bf16.msra.mxu0 %v558
  %684 = vmatprep.subr.bf16.mxu0 %v555
  %685 = vmatpush1.bf16.msra.mxu0 %v554
  %686 = vmatprep.subr.bf16.mxu0 %v551
  %687 = vmatpush1.bf16.msra.mxu0 %v550
  %688 = vmatprep.subr.bf16.mxu0 %v547
  %689 = vmatpush1.bf16.msra.mxu0 %v546
  %690 = vmatprep.subr.bf16.mxu0 %v607
  %691 = vmatpush2.bf16.msra.mxu0 %v606
  %692 = vmatprep.subr.bf16.mxu0 %v603
  %693 = vmatpush2.bf16.msra.mxu0 %v602
  %694 = vmatprep.subr.bf16.mxu0 %v599
  %695 = vmatpush2.bf16.msra.mxu0 %v598
  %696 = vmatprep.subr.bf16.mxu0 %v595
  %697 = vmatpush2.bf16.msra.mxu0 %v594
  %698 = vmatprep.subr.bf16.mxu0 %v591
  %699 = vmatpush2.bf16.msra.mxu0 %v590
  %700 = vmatprep.subr.bf16.mxu0 %v587
  %701 = vmatpush2.bf16.msra.mxu0 %v586
  %702 = vmatprep.subr.bf16.mxu0 %v583
  %703 = vmatpush2.bf16.msra.mxu0 %v582
  %704 = vmatprep.subr.bf16.mxu0 %v579
  %705 = vmatpush2.bf16.msra.mxu0 %v578
  %706 = vmatprep.mubr.bf16.mxu0 %v289
  %707 = vmatmul.mubr.bf16.gmra.mxu0 %v288
  %v708 = vpop.f32.mrf.mxu0
  %v709 = vadd.f32 0.0, %v708
  %v710 = vpop.f32.mrf.mxu0
  %v711 = vadd.f32 0.0, %v710
  %v712 = vpop.f32.mrf.mxu0
  %v713 = vadd.f32 0.0, %v712
  %v714 = vpop.f32.mrf.mxu0
  %v715 = vadd.f32 0.0, %v714
  %716 = vdwg.mxu0
  %717 = vmatprep.subr.bf16.mxu0 %v577
  %718 = vmatpush1.bf16.msra.mxu0 %v576
  %719 = vmatprep.subr.bf16.mxu0 %v573
  %720 = vmatpush1.bf16.msra.mxu0 %v572
  %721 = vmatprep.subr.bf16.mxu0 %v569
  %722 = vmatpush1.bf16.msra.mxu0 %v568
  %723 = vmatprep.subr.bf16.mxu0 %v565
  %724 = vmatpush1.bf16.msra.mxu0 %v564
  %725 = vmatprep.subr.bf16.mxu0 %v561
  %726 = vmatpush1.bf16.msra.mxu0 %v560
  %727 = vmatprep.subr.bf16.mxu0 %v557
  %728 = vmatpush1.bf16.msra.mxu0 %v556
  %729 = vmatprep.subr.bf16.mxu0 %v553
  %730 = vmatpush1.bf16.msra.mxu0 %v552
  %731 = vmatprep.subr.bf16.mxu0 %v549
  %732 = vmatpush1.bf16.msra.mxu0 %v548
  %733 = vmatprep.subr.bf16.mxu0 %v609
  %734 = vmatpush2.bf16.msra.mxu0 %v608
  %735 = vmatprep.subr.bf16.mxu0 %v605
  %736 = vmatpush2.bf16.msra.mxu0 %v604
  %737 = vmatprep.subr.bf16.mxu0 %v601
  %738 = vmatpush2.bf16.msra.mxu0 %v600
  %739 = vmatprep.subr.bf16.mxu0 %v597
  %740 = vmatpush2.bf16.msra.mxu0 %v596
  %741 = vmatprep.subr.bf16.mxu0 %v593
  %742 = vmatpush2.bf16.msra.mxu0 %v592
  %743 = vmatprep.subr.bf16.mxu0 %v589
  %744 = vmatpush2.bf16.msra.mxu0 %v588
  %745 = vmatprep.subr.bf16.mxu0 %v585
  %746 = vmatpush2.bf16.msra.mxu0 %v584
  %747 = vmatprep.subr.bf16.mxu0 %v581
  %748 = vmatpush2.bf16.msra.mxu0 %v580
  %749 = vmatprep.mubr.bf16.mxu0 %v289
  %750 = vmatmul.mubr.bf16.gmra.mxu0 %v288
  %v751 = vpop.f32.mrf.mxu0
  %v752 = vadd.f32 0.0, %v751
  %v753 = vpop.f32.mrf.mxu0
  %v754 = vadd.f32 0.0, %v753
  %v755 = vpop.f32.mrf.mxu0
  %v756 = vadd.f32 0.0, %v755
  %v757 = vpop.f32.mrf.mxu0
  %v758 = vadd.f32 0.0, %v757
  %759 = vdwg.mxu0
  %v824 = vunpack.c.l.b16 %v224
  %v825 = vunpack.c.h.b16 %v224
  %v826 = vunpack.c.l.b16 %v225
  %v827 = vunpack.c.h.b16 %v225
  %v828 = vunpack.c.l.b16 %v226
  %v829 = vunpack.c.h.b16 %v226
  %v830 = vunpack.c.l.b16 %v227
  %v831 = vunpack.c.h.b16 %v227
  %v832 = vunpack.c.l.b16 %v228
  %v833 = vunpack.c.h.b16 %v228
  %v834 = vunpack.c.l.b16 %v229
  %v835 = vunpack.c.h.b16 %v229
  %v836 = vunpack.c.l.b16 %v230
  %v837 = vunpack.c.h.b16 %v230
  %v838 = vunpack.c.l.b16 %v231
  %v839 = vunpack.c.h.b16 %v231
  %v840 = vunpack.c.l.b16 %v232
  %v841 = vunpack.c.h.b16 %v232
  %v842 = vunpack.c.l.b16 %v233
  %v843 = vunpack.c.h.b16 %v233
  %v844 = vunpack.c.l.b16 %v234
  %v845 = vunpack.c.h.b16 %v234
  %v846 = vunpack.c.l.b16 %v235
  %v847 = vunpack.c.h.b16 %v235
  %v848 = vunpack.c.l.b16 %v236
  %v849 = vunpack.c.h.b16 %v236
  %v850 = vunpack.c.l.b16 %v237
  %v851 = vunpack.c.h.b16 %v237
  %v852 = vunpack.c.l.b16 %v238
  %v853 = vunpack.c.h.b16 %v238
  %v854 = vunpack.c.l.b16 %v239
  %v855 = vunpack.c.h.b16 %v239
  %v856 = vunpack.c.l.b16 %v240
  %v857 = vunpack.c.h.b16 %v240
  %v858 = vunpack.c.l.b16 %v241
  %v859 = vunpack.c.h.b16 %v241
  %v860 = vunpack.c.l.b16 %v242
  %v861 = vunpack.c.h.b16 %v242
  %v862 = vunpack.c.l.b16 %v243
  %v863 = vunpack.c.h.b16 %v243
  %v864 = vunpack.c.l.b16 %v244
  %v865 = vunpack.c.h.b16 %v244
  %v866 = vunpack.c.l.b16 %v245
  %v867 = vunpack.c.h.b16 %v245
  %v868 = vunpack.c.l.b16 %v246
  %v869 = vunpack.c.h.b16 %v246
  %v870 = vunpack.c.l.b16 %v247
  %v871 = vunpack.c.h.b16 %v247
  %v872 = vunpack.c.l.b16 %v248
  %v873 = vunpack.c.h.b16 %v248
  %v874 = vunpack.c.l.b16 %v249
  %v875 = vunpack.c.h.b16 %v249
  %v876 = vunpack.c.l.b16 %v250
  %v877 = vunpack.c.h.b16 %v250
  %v878 = vunpack.c.l.b16 %v251
  %v879 = vunpack.c.h.b16 %v251
  %v880 = vunpack.c.l.b16 %v252
  %v881 = vunpack.c.h.b16 %v252
  %v882 = vunpack.c.l.b16 %v253
  %v883 = vunpack.c.h.b16 %v253
  %v884 = vunpack.c.l.b16 %v254
  %v885 = vunpack.c.h.b16 %v254
  %v886 = vunpack.c.l.b16 %v255
  %v887 = vunpack.c.h.b16 %v255
  %v888 = vunpack.c.l.b16 %v256
  %v889 = vunpack.c.h.b16 %v256
  %v890 = vunpack.c.l.b16 %v257
  %v891 = vunpack.c.h.b16 %v257
  %v892 = vunpack.c.l.b16 %v258
  %v893 = vunpack.c.h.b16 %v258
  %v894 = vunpack.c.l.b16 %v259
  %v895 = vunpack.c.h.b16 %v259
  %v896 = vunpack.c.l.b16 %v260
  %v897 = vunpack.c.h.b16 %v260
  %v898 = vunpack.c.l.b16 %v261
  %v899 = vunpack.c.h.b16 %v261
  %v900 = vunpack.c.l.b16 %v262
  %v901 = vunpack.c.h.b16 %v262
  %v902 = vunpack.c.l.b16 %v263
  %v903 = vunpack.c.h.b16 %v263
  %v904 = vunpack.c.l.b16 %v264
  %v905 = vunpack.c.h.b16 %v264
  %v906 = vunpack.c.l.b16 %v265
  %v907 = vunpack.c.h.b16 %v265
  %v908 = vunpack.c.l.b16 %v266
  %v909 = vunpack.c.h.b16 %v266
  %v910 = vunpack.c.l.b16 %v267
  %v911 = vunpack.c.h.b16 %v267
  %v912 = vunpack.c.l.b16 %v268
  %v913 = vunpack.c.h.b16 %v268
  %v914 = vunpack.c.l.b16 %v269
  %v915 = vunpack.c.h.b16 %v269
  %v916 = vunpack.c.l.b16 %v270
  %v917 = vunpack.c.h.b16 %v270
  %v918 = vunpack.c.l.b16 %v271
  %v919 = vunpack.c.h.b16 %v271
  %v920 = vunpack.c.l.b16 %v272
  %v921 = vunpack.c.h.b16 %v272
  %v922 = vunpack.c.l.b16 %v273
  %v923 = vunpack.c.h.b16 %v273
  %v924 = vunpack.c.l.b16 %v274
  %v925 = vunpack.c.h.b16 %v274
  %v926 = vunpack.c.l.b16 %v275
  %v927 = vunpack.c.h.b16 %v275
  %v928 = vunpack.c.l.b16 %v276
  %v929 = vunpack.c.h.b16 %v276
  %v930 = vunpack.c.l.b16 %v277
  %v931 = vunpack.c.h.b16 %v277
  %v932 = vunpack.c.l.b16 %v278
  %v933 = vunpack.c.h.b16 %v278
  %v934 = vunpack.c.l.b16 %v279
  %v935 = vunpack.c.h.b16 %v279
  %v936 = vunpack.c.l.b16 %v280
  %v937 = vunpack.c.h.b16 %v280
  %v938 = vunpack.c.l.b16 %v281
  %v939 = vunpack.c.h.b16 %v281
  %v940 = vunpack.c.l.b16 %v282
  %v941 = vunpack.c.h.b16 %v282
  %v942 = vunpack.c.l.b16 %v283
  %v943 = vunpack.c.h.b16 %v283
  %v944 = vunpack.c.l.b16 %v284
  %v945 = vunpack.c.h.b16 %v284
  %v946 = vunpack.c.l.b16 %v285
  %v947 = vunpack.c.h.b16 %v285
  %v948 = vunpack.c.l.b16 %v286
  %v949 = vunpack.c.h.b16 %v286
  %v950 = vunpack.c.l.b16 %v287
  %v951 = vunpack.c.h.b16 %v287
  %v952 = vpack.c.b16 %v828, %v824
  %v953 = vpack.c.b16 %v829, %v825
  %v954 = vpack.c.b16 %v830, %v826
  %v955 = vpack.c.b16 %v831, %v827
  %v956 = vpack.c.b16 %v836, %v832
  %v957 = vpack.c.b16 %v837, %v833
  %v958 = vpack.c.b16 %v838, %v834
  %v959 = vpack.c.b16 %v839, %v835
  %v960 = vpack.c.b16 %v844, %v840
  %v961 = vpack.c.b16 %v845, %v841
  %v962 = vpack.c.b16 %v846, %v842
  %v963 = vpack.c.b16 %v847, %v843
  %v964 = vpack.c.b16 %v852, %v848
  %v965 = vpack.c.b16 %v853, %v849
  %v966 = vpack.c.b16 %v854, %v850
  %v967 = vpack.c.b16 %v855, %v851
  %v968 = vpack.c.b16 %v860, %v856
  %v969 = vpack.c.b16 %v861, %v857
  %v970 = vpack.c.b16 %v862, %v858
  %v971 = vpack.c.b16 %v863, %v859
  %v972 = vpack.c.b16 %v868, %v864
  %v973 = vpack.c.b16 %v869, %v865
  %v974 = vpack.c.b16 %v870, %v866
  %v975 = vpack.c.b16 %v871, %v867
  %v976 = vpack.c.b16 %v876, %v872
  %v977 = vpack.c.b16 %v877, %v873
  %v978 = vpack.c.b16 %v878, %v874
  %v979 = vpack.c.b16 %v879, %v875
  %v980 = vpack.c.b16 %v884, %v880
  %v981 = vpack.c.b16 %v885, %v881
  %v982 = vpack.c.b16 %v886, %v882
  %v983 = vpack.c.b16 %v887, %v883
  %v984 = vpack.c.b16 %v892, %v888
  %v985 = vpack.c.b16 %v893, %v889
  %v986 = vpack.c.b16 %v894, %v890
  %v987 = vpack.c.b16 %v895, %v891
  %v988 = vpack.c.b16 %v900, %v896
  %v989 = vpack.c.b16 %v901, %v897
  %v990 = vpack.c.b16 %v902, %v898
  %v991 = vpack.c.b16 %v903, %v899
  %v992 = vpack.c.b16 %v908, %v904
  %v993 = vpack.c.b16 %v909, %v905
  %v994 = vpack.c.b16 %v910, %v906
  %v995 = vpack.c.b16 %v911, %v907
  %v996 = vpack.c.b16 %v916, %v912
  %v997 = vpack.c.b16 %v917, %v913
  %v998 = vpack.c.b16 %v918, %v914
  %v999 = vpack.c.b16 %v919, %v915
  %v1000 = vpack.c.b16 %v924, %v920
  %v1001 = vpack.c.b16 %v925, %v921
  %v1002 = vpack.c.b16 %v926, %v922
  %v1003 = vpack.c.b16 %v927, %v923
  %v1004 = vpack.c.b16 %v932, %v928
  %v1005 = vpack.c.b16 %v933, %v929
  %v1006 = vpack.c.b16 %v934, %v930
  %v1007 = vpack.c.b16 %v935, %v931
  %v1008 = vpack.c.b16 %v940, %v936
  %v1009 = vpack.c.b16 %v941, %v937
  %v1010 = vpack.c.b16 %v942, %v938
  %v1011 = vpack.c.b16 %v943, %v939
  %v1012 = vpack.c.b16 %v948, %v944
  %v1013 = vpack.c.b16 %v949, %v945
  %v1014 = vpack.c.b16 %v950, %v946
  %v1015 = vpack.c.b16 %v951, %v947
  %1080 = vmatprep.subr.bf16.mxu0 %v981
  %1081 = vmatpush1.bf16.msra.mxu0 %v980
  %1082 = vmatprep.subr.bf16.mxu0 %v977
  %1083 = vmatpush1.bf16.msra.mxu0 %v976
  %1084 = vmatprep.subr.bf16.mxu0 %v973
  %1085 = vmatpush1.bf16.msra.mxu0 %v972
  %1086 = vmatprep.subr.bf16.mxu0 %v969
  %1087 = vmatpush1.bf16.msra.mxu0 %v968
  %1088 = vmatprep.subr.bf16.mxu0 %v965
  %1089 = vmatpush1.bf16.msra.mxu0 %v964
  %1090 = vmatprep.subr.bf16.mxu0 %v961
  %1091 = vmatpush1.bf16.msra.mxu0 %v960
  %1092 = vmatprep.subr.bf16.mxu0 %v957
  %1093 = vmatpush1.bf16.msra.mxu0 %v956
  %1094 = vmatprep.subr.bf16.mxu0 %v953
  %1095 = vmatpush1.bf16.msra.mxu0 %v952
  %1096 = vmatprep.subr.bf16.mxu0 %v1013
  %1097 = vmatpush2.bf16.msra.mxu0 %v1012
  %1098 = vmatprep.subr.bf16.mxu0 %v1009
  %1099 = vmatpush2.bf16.msra.mxu0 %v1008
  %1100 = vmatprep.subr.bf16.mxu0 %v1005
  %1101 = vmatpush2.bf16.msra.mxu0 %v1004
  %1102 = vmatprep.subr.bf16.mxu0 %v1001
  %1103 = vmatpush2.bf16.msra.mxu0 %v1000
  %1104 = vmatprep.subr.bf16.mxu0 %v997
  %1105 = vmatpush2.bf16.msra.mxu0 %v996
  %1106 = vmatprep.subr.bf16.mxu0 %v993
  %1107 = vmatpush2.bf16.msra.mxu0 %v992
  %1108 = vmatprep.subr.bf16.mxu0 %v989
  %1109 = vmatpush2.bf16.msra.mxu0 %v988
  %1110 = vmatprep.subr.bf16.mxu0 %v985
  %1111 = vmatpush2.bf16.msra.mxu0 %v984
  %1112 = vmatprep.mubr.bf16.mxu0 %v223
  %1113 = vmatmul.mubr.bf16.gmra.mxu0 %v222
  %v1114 = vpop.f32.mrf.mxu0
  %v1115 = vadd.f32 %v709, %v1114
  %v1116 = vpop.f32.mrf.mxu0
  %v1117 = vadd.f32 %v711, %v1116
  %v1118 = vpop.f32.mrf.mxu0
  %v1119 = vadd.f32 %v713, %v1118
  %v1120 = vpop.f32.mrf.mxu0
  %v1121 = vadd.f32 %v715, %v1120
  %1122 = vdwg.mxu0
  %1123 = vmatprep.subr.bf16.mxu0 %v983
  %1124 = vmatpush1.bf16.msra.mxu0 %v982
  %1125 = vmatprep.subr.bf16.mxu0 %v979
  %1126 = vmatpush1.bf16.msra.mxu0 %v978
  %1127 = vmatprep.subr.bf16.mxu0 %v975
  %1128 = vmatpush1.bf16.msra.mxu0 %v974
  %1129 = vmatprep.subr.bf16.mxu0 %v971
  %1130 = vmatpush1.bf16.msra.mxu0 %v970
  %1131 = vmatprep.subr.bf16.mxu0 %v967
  %1132 = vmatpush1.bf16.msra.mxu0 %v966
  %1133 = vmatprep.subr.bf16.mxu0 %v963
  %1134 = vmatpush1.bf16.msra.mxu0 %v962
  %1135 = vmatprep.subr.bf16.mxu0 %v959
  %1136 = vmatpush1.bf16.msra.mxu0 %v958
  %1137 = vmatprep.subr.bf16.mxu0 %v955
  %1138 = vmatpush1.bf16.msra.mxu0 %v954
  %1139 = vmatprep.subr.bf16.mxu0 %v1015
  %1140 = vmatpush2.bf16.msra.mxu0 %v1014
  %1141 = vmatprep.subr.bf16.mxu0 %v1011
  %1142 = vmatpush2.bf16.msra.mxu0 %v1010
  %1143 = vmatprep.subr.bf16.mxu0 %v1007
  %1144 = vmatpush2.bf16.msra.mxu0 %v1006
  %1145 = vmatprep.subr.bf16.mxu0 %v1003
  %1146 = vmatpush2.bf16.msra.mxu0 %v1002
  %1147 = vmatprep.subr.bf16.mxu0 %v999
  %1148 = vmatpush2.bf16.msra.mxu0 %v998
  %1149 = vmatprep.subr.bf16.mxu0 %v995
  %1150 = vmatpush2.bf16.msra.mxu0 %v994
  %1151 = vmatprep.subr.bf16.mxu0 %v991
  %1152 = vmatpush2.bf16.msra.mxu0 %v990
  %1153 = vmatprep.subr.bf16.mxu0 %v987
  %1154 = vmatpush2.bf16.msra.mxu0 %v986
  %1155 = vmatprep.mubr.bf16.mxu0 %v223
  %1156 = vmatmul.mubr.bf16.gmra.mxu0 %v222
  %v1157 = vpop.f32.mrf.mxu0
  %v1158 = vadd.f32 %v752, %v1157
  %v1159 = vpop.f32.mrf.mxu0
  %v1160 = vadd.f32 %v754, %v1159
  %v1161 = vpop.f32.mrf.mxu0
  %v1162 = vadd.f32 %v756, %v1161
  %v1163 = vpop.f32.mrf.mxu0
  %v1164 = vadd.f32 %v758, %v1163
  %1165 = vdwg.mxu0
  %v1166 = vpack.c.bf16 %v208, %v204
  %v1167 = vpack.c.bf16 %v210, %v206
  %v1168 = vld [vmem:[%s2 + $0x400] sm:$0xff]
  %v1169 = vld [vmem:[%s2 + $0x408] sm:$0xff]
  %v1170 = vld [vmem:[%s2 + $0x410] sm:$0xff]
  %v1171 = vld [vmem:[%s2 + $0x418] sm:$0xff]
  %v1172 = vld [vmem:[%s2 + $0x420] sm:$0xff]
  %v1173 = vld [vmem:[%s2 + $0x428] sm:$0xff]
  %v1174 = vld [vmem:[%s2 + $0x430] sm:$0xff]
  %v1175 = vld [vmem:[%s2 + $0x438] sm:$0xff]
  %v1176 = vld [vmem:[%s2 + $0x440] sm:$0xff]
  %v1177 = vld [vmem:[%s2 + $0x448] sm:$0xff]
  %v1178 = vld [vmem:[%s2 + $0x450] sm:$0xff]
  %v1179 = vld [vmem:[%s2 + $0x458] sm:$0xff]
  %v1180 = vld [vmem:[%s2 + $0x460] sm:$0xff]
  %v1181 = vld [vmem:[%s2 + $0x468] sm:$0xff]
  %v1182 = vld [vmem:[%s2 + $0x470] sm:$0xff]
  %v1183 = vld [vmem:[%s2 + $0x478] sm:$0xff]
  %v1184 = vld [vmem:[%s2 + $0x480] sm:$0xff]
  %v1185 = vld [vmem:[%s2 + $0x488] sm:$0xff]
  %v1186 = vld [vmem:[%s2 + $0x490] sm:$0xff]
  %v1187 = vld [vmem:[%s2 + $0x498] sm:$0xff]
  %v1188 = vld [vmem:[%s2 + $0x4a0] sm:$0xff]
  %v1189 = vld [vmem:[%s2 + $0x4a8] sm:$0xff]
  %v1190 = vld [vmem:[%s2 + $0x4b0] sm:$0xff]
  %v1191 = vld [vmem:[%s2 + $0x4b8] sm:$0xff]
  %v1192 = vld [vmem:[%s2 + $0x4c0] sm:$0xff]
  %v1193 = vld [vmem:[%s2 + $0x4c8] sm:$0xff]
  %v1194 = vld [vmem:[%s2 + $0x4d0] sm:$0xff]
  %v1195 = vld [vmem:[%s2 + $0x4d8] sm:$0xff]
  %v1196 = vld [vmem:[%s2 + $0x4e0] sm:$0xff]
  %v1197 = vld [vmem:[%s2 + $0x4e8] sm:$0xff]
  %v1198 = vld [vmem:[%s2 + $0x4f0] sm:$0xff]
  %v1199 = vld [vmem:[%s2 + $0x4f8] sm:$0xff]
  %v1200 = vld [vmem:[%s2 + $0x500] sm:$0xff]
  %v1201 = vld [vmem:[%s2 + $0x508] sm:$0xff]
  %v1202 = vld [vmem:[%s2 + $0x510] sm:$0xff]
  %v1203 = vld [vmem:[%s2 + $0x518] sm:$0xff]
  %v1204 = vld [vmem:[%s2 + $0x520] sm:$0xff]
  %v1205 = vld [vmem:[%s2 + $0x528] sm:$0xff]
  %v1206 = vld [vmem:[%s2 + $0x530] sm:$0xff]
  %v1207 = vld [vmem:[%s2 + $0x538] sm:$0xff]
  %v1208 = vld [vmem:[%s2 + $0x540] sm:$0xff]
  %v1209 = vld [vmem:[%s2 + $0x548] sm:$0xff]
  %v1210 = vld [vmem:[%s2 + $0x550] sm:$0xff]
  %v1211 = vld [vmem:[%s2 + $0x558] sm:$0xff]
  %v1212 = vld [vmem:[%s2 + $0x560] sm:$0xff]
  %v1213 = vld [vmem:[%s2 + $0x568] sm:$0xff]
  %v1214 = vld [vmem:[%s2 + $0x570] sm:$0xff]
  %v1215 = vld [vmem:[%s2 + $0x578] sm:$0xff]
  %v1216 = vld [vmem:[%s2 + $0x580] sm:$0xff]
  %v1217 = vld [vmem:[%s2 + $0x588] sm:$0xff]
  %v1218 = vld [vmem:[%s2 + $0x590] sm:$0xff]
  %v1219 = vld [vmem:[%s2 + $0x598] sm:$0xff]
  %v1220 = vld [vmem:[%s2 + $0x5a0] sm:$0xff]
  %v1221 = vld [vmem:[%s2 + $0x5a8] sm:$0xff]
  %v1222 = vld [vmem:[%s2 + $0x5b0] sm:$0xff]
  %v1223 = vld [vmem:[%s2 + $0x5b8] sm:$0xff]
  %v1224 = vld [vmem:[%s2 + $0x5c0] sm:$0xff]
  %v1225 = vld [vmem:[%s2 + $0x5c8] sm:$0xff]
  %v1226 = vld [vmem:[%s2 + $0x5d0] sm:$0xff]
  %v1227 = vld [vmem:[%s2 + $0x5d8] sm:$0xff]
  %v1228 = vld [vmem:[%s2 + $0x5e0] sm:$0xff]
  %v1229 = vld [vmem:[%s2 + $0x5e8] sm:$0xff]
  %v1230 = vld [vmem:[%s2 + $0x5f0] sm:$0xff]
  %v1231 = vld [vmem:[%s2 + $0x5f8] sm:$0xff]
  %v1296 = vunpack.c.l.b16 %v1168
  %v1297 = vunpack.c.h.b16 %v1168
  %v1298 = vunpack.c.l.b16 %v1169
  %v1299 = vunpack.c.h.b16 %v1169
  %v1300 = vunpack.c.l.b16 %v1170
  %v1301 = vunpack.c.h.b16 %v1170
  %v1302 = vunpack.c.l.b16 %v1171
  %v1303 = vunpack.c.h.b16 %v1171
  %v1304 = vunpack.c.l.b16 %v1172
  %v1305 = vunpack.c.h.b16 %v1172
  %v1306 = vunpack.c.l.b16 %v1173
  %v1307 = vunpack.c.h.b16 %v1173
  %v1308 = vunpack.c.l.b16 %v1174
  %v1309 = vunpack.c.h.b16 %v1174
  %v1310 = vunpack.c.l.b16 %v1175
  %v1311 = vunpack.c.h.b16 %v1175
  %v1312 = vunpack.c.l.b16 %v1176
  %v1313 = vunpack.c.h.b16 %v1176
  %v1314 = vunpack.c.l.b16 %v1177
  %v1315 = vunpack.c.h.b16 %v1177
  %v1316 = vunpack.c.l.b16 %v1178
  %v1317 = vunpack.c.h.b16 %v1178
  %v1318 = vunpack.c.l.b16 %v1179
  %v1319 = vunpack.c.h.b16 %v1179
  %v1320 = vunpack.c.l.b16 %v1180
  %v1321 = vunpack.c.h.b16 %v1180
  %v1322 = vunpack.c.l.b16 %v1181
  %v1323 = vunpack.c.h.b16 %v1181
  %v1324 = vunpack.c.l.b16 %v1182
  %v1325 = vunpack.c.h.b16 %v1182
  %v1326 = vunpack.c.l.b16 %v1183
  %v1327 = vunpack.c.h.b16 %v1183
  %v1328 = vunpack.c.l.b16 %v1184
  %v1329 = vunpack.c.h.b16 %v1184
  %v1330 = vunpack.c.l.b16 %v1185
  %v1331 = vunpack.c.h.b16 %v1185
  %v1332 = vunpack.c.l.b16 %v1186
  %v1333 = vunpack.c.h.b16 %v1186
  %v1334 = vunpack.c.l.b16 %v1187
  %v1335 = vunpack.c.h.b16 %v1187
  %v1336 = vunpack.c.l.b16 %v1188
  %v1337 = vunpack.c.h.b16 %v1188
  %v1338 = vunpack.c.l.b16 %v1189
  %v1339 = vunpack.c.h.b16 %v1189
  %v1340 = vunpack.c.l.b16 %v1190
  %v1341 = vunpack.c.h.b16 %v1190
  %v1342 = vunpack.c.l.b16 %v1191
  %v1343 = vunpack.c.h.b16 %v1191
  %v1344 = vunpack.c.l.b16 %v1192
  %v1345 = vunpack.c.h.b16 %v1192
  %v1346 = vunpack.c.l.b16 %v1193
  %v1347 = vunpack.c.h.b16 %v1193
  %v1348 = vunpack.c.l.b16 %v1194
  %v1349 = vunpack.c.h.b16 %v1194
  %v1350 = vunpack.c.l.b16 %v1195
  %v1351 = vunpack.c.h.b16 %v1195
  %v1352 = vunpack.c.l.b16 %v1196
  %v1353 = vunpack.c.h.b16 %v1196
  %v1354 = vunpack.c.l.b16 %v1197
  %v1355 = vunpack.c.h.b16 %v1197
  %v1356 = vunpack.c.l.b16 %v1198
  %v1357 = vunpack.c.h.b16 %v1198
  %v1358 = vunpack.c.l.b16 %v1199
  %v1359 = vunpack.c.h.b16 %v1199
  %v1360 = vunpack.c.l.b16 %v1200
  %v1361 = vunpack.c.h.b16 %v1200
  %v1362 = vunpack.c.l.b16 %v1201
  %v1363 = vunpack.c.h.b16 %v1201
  %v1364 = vunpack.c.l.b16 %v1202
  %v1365 = vunpack.c.h.b16 %v1202
  %v1366 = vunpack.c.l.b16 %v1203
  %v1367 = vunpack.c.h.b16 %v1203
  %v1368 = vunpack.c.l.b16 %v1204
  %v1369 = vunpack.c.h.b16 %v1204
  %v1370 = vunpack.c.l.b16 %v1205
  %v1371 = vunpack.c.h.b16 %v1205
  %v1372 = vunpack.c.l.b16 %v1206
  %v1373 = vunpack.c.h.b16 %v1206
  %v1374 = vunpack.c.l.b16 %v1207
  %v1375 = vunpack.c.h.b16 %v1207
  %v1376 = vunpack.c.l.b16 %v1208
  %v1377 = vunpack.c.h.b16 %v1208
  %v1378 = vunpack.c.l.b16 %v1209
  %v1379 = vunpack.c.h.b16 %v1209
  %v1380 = vunpack.c.l.b16 %v1210
  %v1381 = vunpack.c.h.b16 %v1210
  %v1382 = vunpack.c.l.b16 %v1211
  %v1383 = vunpack.c.h.b16 %v1211
  %v1384 = vunpack.c.l.b16 %v1212
  %v1385 = vunpack.c.h.b16 %v1212
  %v1386 = vunpack.c.l.b16 %v1213
  %v1387 = vunpack.c.h.b16 %v1213
  %v1388 = vunpack.c.l.b16 %v1214
  %v1389 = vunpack.c.h.b16 %v1214
  %v1390 = vunpack.c.l.b16 %v1215
  %v1391 = vunpack.c.h.b16 %v1215
  %v1392 = vunpack.c.l.b16 %v1216
  %v1393 = vunpack.c.h.b16 %v1216
  %v1394 = vunpack.c.l.b16 %v1217
  %v1395 = vunpack.c.h.b16 %v1217
  %v1396 = vunpack.c.l.b16 %v1218
  %v1397 = vunpack.c.h.b16 %v1218
  %v1398 = vunpack.c.l.b16 %v1219
  %v1399 = vunpack.c.h.b16 %v1219
  %v1400 = vunpack.c.l.b16 %v1220
  %v1401 = vunpack.c.h.b16 %v1220
  %v1402 = vunpack.c.l.b16 %v1221
  %v1403 = vunpack.c.h.b16 %v1221
  %v1404 = vunpack.c.l.b16 %v1222
  %v1405 = vunpack.c.h.b16 %v1222
  %v1406 = vunpack.c.l.b16 %v1223
  %v1407 = vunpack.c.h.b16 %v1223
  %v1408 = vunpack.c.l.b16 %v1224
  %v1409 = vunpack.c.h.b16 %v1224
  %v1410 = vunpack.c.l.b16 %v1225
  %v1411 = vunpack.c.h.b16 %v1225
  %v1412 = vunpack.c.l.b16 %v1226
  %v1413 = vunpack.c.h.b16 %v1226
  %v1414 = vunpack.c.l.b16 %v1227
  %v1415 = vunpack.c.h.b16 %v1227
  %v1416 = vunpack.c.l.b16 %v1228
  %v1417 = vunpack.c.h.b16 %v1228
  %v1418 = vunpack.c.l.b16 %v1229
  %v1419 = vunpack.c.h.b16 %v1229
  %v1420 = vunpack.c.l.b16 %v1230
  %v1421 = vunpack.c.h.b16 %v1230
  %v1422 = vunpack.c.l.b16 %v1231
  %v1423 = vunpack.c.h.b16 %v1231
  %v1424 = vpack.c.b16 %v1300, %v1296
  %v1425 = vpack.c.b16 %v1301, %v1297
  %v1426 = vpack.c.b16 %v1302, %v1298
  %v1427 = vpack.c.b16 %v1303, %v1299
  %v1428 = vpack.c.b16 %v1308, %v1304
  %v1429 = vpack.c.b16 %v1309, %v1305
  %v1430 = vpack.c.b16 %v1310, %v1306
  %v1431 = vpack.c.b16 %v1311, %v1307
  %v1432 = vpack.c.b16 %v1316, %v1312
  %v1433 = vpack.c.b16 %v1317, %v1313
  %v1434 = vpack.c.b16 %v1318, %v1314
  %v1435 = vpack.c.b16 %v1319, %v1315
  %v1436 = vpack.c.b16 %v1324, %v1320
  %v1437 = vpack.c.b16 %v1325, %v1321
  %v1438 = vpack.c.b16 %v1326, %v1322
  %v1439 = vpack.c.b16 %v1327, %v1323
  %v1440 = vpack.c.b16 %v1332, %v1328
  %v1441 = vpack.c.b16 %v1333, %v1329
  %v1442 = vpack.c.b16 %v1334, %v1330
  %v1443 = vpack.c.b16 %v1335, %v1331
  %v1444 = vpack.c.b16 %v1340, %v1336
  %v1445 = vpack.c.b16 %v1341, %v1337
  %v1446 = vpack.c.b16 %v1342, %v1338
  %v1447 = vpack.c.b16 %v1343, %v1339
  %v1448 = vpack.c.b16 %v1348, %v1344
  %v1449 = vpack.c.b16 %v1349, %v1345
  %v1450 = vpack.c.b16 %v1350, %v1346
  %v1451 = vpack.c.b16 %v1351, %v1347
  %v1452 = vpack.c.b16 %v1356, %v1352
  %v1453 = vpack.c.b16 %v1357, %v1353
  %v1454 = vpack.c.b16 %v1358, %v1354
  %v1455 = vpack.c.b16 %v1359, %v1355
  %v1456 = vpack.c.b16 %v1364, %v1360
  %v1457 = vpack.c.b16 %v1365, %v1361
  %v1458 = vpack.c.b16 %v1366, %v1362
  %v1459 = vpack.c.b16 %v1367, %v1363
  %v1460 = vpack.c.b16 %v1372, %v1368
  %v1461 = vpack.c.b16 %v1373, %v1369
  %v1462 = vpack.c.b16 %v1374, %v1370
  %v1463 = vpack.c.b16 %v1375, %v1371
  %v1464 = vpack.c.b16 %v1380, %v1376
  %v1465 = vpack.c.b16 %v1381, %v1377
  %v1466 = vpack.c.b16 %v1382, %v1378
  %v1467 = vpack.c.b16 %v1383, %v1379
  %v1468 = vpack.c.b16 %v1388, %v1384
  %v1469 = vpack.c.b16 %v1389, %v1385
  %v1470 = vpack.c.b16 %v1390, %v1386
  %v1471 = vpack.c.b16 %v1391, %v1387
  %v1472 = vpack.c.b16 %v1396, %v1392
  %v1473 = vpack.c.b16 %v1397, %v1393
  %v1474 = vpack.c.b16 %v1398, %v1394
  %v1475 = vpack.c.b16 %v1399, %v1395
  %v1476 = vpack.c.b16 %v1404, %v1400
  %v1477 = vpack.c.b16 %v1405, %v1401
  %v1478 = vpack.c.b16 %v1406, %v1402
  %v1479 = vpack.c.b16 %v1407, %v1403
  %v1480 = vpack.c.b16 %v1412, %v1408
  %v1481 = vpack.c.b16 %v1413, %v1409
  %v1482 = vpack.c.b16 %v1414, %v1410
  %v1483 = vpack.c.b16 %v1415, %v1411
  %v1484 = vpack.c.b16 %v1420, %v1416
  %v1485 = vpack.c.b16 %v1421, %v1417
  %v1486 = vpack.c.b16 %v1422, %v1418
  %v1487 = vpack.c.b16 %v1423, %v1419
  %1552 = vmatprep.subr.bf16.mxu0 %v1453
  %1553 = vmatpush1.bf16.msra.mxu0 %v1452
  %1554 = vmatprep.subr.bf16.mxu0 %v1449
  %1555 = vmatpush1.bf16.msra.mxu0 %v1448
  %1556 = vmatprep.subr.bf16.mxu0 %v1445
  %1557 = vmatpush1.bf16.msra.mxu0 %v1444
  %1558 = vmatprep.subr.bf16.mxu0 %v1441
  %1559 = vmatpush1.bf16.msra.mxu0 %v1440
  %1560 = vmatprep.subr.bf16.mxu0 %v1437
  %1561 = vmatpush1.bf16.msra.mxu0 %v1436
  %1562 = vmatprep.subr.bf16.mxu0 %v1433
  %1563 = vmatpush1.bf16.msra.mxu0 %v1432
  %1564 = vmatprep.subr.bf16.mxu0 %v1429
  %1565 = vmatpush1.bf16.msra.mxu0 %v1428
  %1566 = vmatprep.subr.bf16.mxu0 %v1425
  %1567 = vmatpush1.bf16.msra.mxu0 %v1424
  %1568 = vmatprep.subr.bf16.mxu0 %v1485
  %1569 = vmatpush2.bf16.msra.mxu0 %v1484
  %1570 = vmatprep.subr.bf16.mxu0 %v1481
  %1571 = vmatpush2.bf16.msra.mxu0 %v1480
  %1572 = vmatprep.subr.bf16.mxu0 %v1477
  %1573 = vmatpush2.bf16.msra.mxu0 %v1476
  %1574 = vmatprep.subr.bf16.mxu0 %v1473
  %1575 = vmatpush2.bf16.msra.mxu0 %v1472
  %1576 = vmatprep.subr.bf16.mxu0 %v1469
  %1577 = vmatpush2.bf16.msra.mxu0 %v1468
  %1578 = vmatprep.subr.bf16.mxu0 %v1465
  %1579 = vmatpush2.bf16.msra.mxu0 %v1464
  %1580 = vmatprep.subr.bf16.mxu0 %v1461
  %1581 = vmatpush2.bf16.msra.mxu0 %v1460
  %1582 = vmatprep.subr.bf16.mxu0 %v1457
  %1583 = vmatpush2.bf16.msra.mxu0 %v1456
  %1584 = vmatprep.mubr.bf16.mxu0 %v1167
  %1585 = vmatmul.mubr.bf16.gmra.mxu0 %v1166
  %v1586 = vpop.f32.mrf.mxu0
  %v1587 = vadd.f32 0.0, %v1586
  %v1588 = vpop.f32.mrf.mxu0
  %v1589 = vadd.f32 0.0, %v1588
  %v1590 = vpop.f32.mrf.mxu0
  %v1591 = vadd.f32 0.0, %v1590
  %v1592 = vpop.f32.mrf.mxu0
  %v1593 = vadd.f32 0.0, %v1592
  %1594 = vdwg.mxu0
  %1595 = vmatprep.subr.bf16.mxu0 %v1455
  %1596 = vmatpush1.bf16.msra.mxu0 %v1454
  %1597 = vmatprep.subr.bf16.mxu0 %v1451
  %1598 = vmatpush1.bf16.msra.mxu0 %v1450
  %1599 = vmatprep.subr.bf16.mxu0 %v1447
  %1600 = vmatpush1.bf16.msra.mxu0 %v1446
  %1601 = vmatprep.subr.bf16.mxu0 %v1443
  %1602 = vmatpush1.bf16.msra.mxu0 %v1442
  %1603 = vmatprep.subr.bf16.mxu0 %v1439
  %1604 = vmatpush1.bf16.msra.mxu0 %v1438
  %1605 = vmatprep.subr.bf16.mxu0 %v1435
  %1606 = vmatpush1.bf16.msra.mxu0 %v1434
  %1607 = vmatprep.subr.bf16.mxu0 %v1431
  %1608 = vmatpush1.bf16.msra.mxu0 %v1430
  %1609 = vmatprep.subr.bf16.mxu0 %v1427
  %1610 = vmatpush1.bf16.msra.mxu0 %v1426
  %1611 = vmatprep.subr.bf16.mxu0 %v1487
  %1612 = vmatpush2.bf16.msra.mxu0 %v1486
  %1613 = vmatprep.subr.bf16.mxu0 %v1483
  %1614 = vmatpush2.bf16.msra.mxu0 %v1482
  %1615 = vmatprep.subr.bf16.mxu0 %v1479
  %1616 = vmatpush2.bf16.msra.mxu0 %v1478
  %1617 = vmatprep.subr.bf16.mxu0 %v1475
  %1618 = vmatpush2.bf16.msra.mxu0 %v1474
  %1619 = vmatprep.subr.bf16.mxu0 %v1471
  %1620 = vmatpush2.bf16.msra.mxu0 %v1470
  %1621 = vmatprep.subr.bf16.mxu0 %v1467
  %1622 = vmatpush2.bf16.msra.mxu0 %v1466
  %1623 = vmatprep.subr.bf16.mxu0 %v1463
  %1624 = vmatpush2.bf16.msra.mxu0 %v1462
  %1625 = vmatprep.subr.bf16.mxu0 %v1459
  %1626 = vmatpush2.bf16.msra.mxu0 %v1458
  %1627 = vmatprep.mubr.bf16.mxu0 %v1167
  %1628 = vmatmul.mubr.bf16.gmra.mxu0 %v1166
  %v1629 = vpop.f32.mrf.mxu0
  %v1630 = vadd.f32 0.0, %v1629
  %v1631 = vpop.f32.mrf.mxu0
  %v1632 = vadd.f32 0.0, %v1631
  %v1633 = vpop.f32.mrf.mxu0
  %v1634 = vadd.f32 0.0, %v1633
  %v1635 = vpop.f32.mrf.mxu0
  %v1636 = vadd.f32 0.0, %v1635
  %1637 = vdwg.mxu0
  %v1638 = vadd.f32 %v1115, %v1587
  %v1639 = vadd.f32 %v1117, %v1589
  %v1640 = vadd.f32 %v1158, %v1630
  %v1641 = vadd.f32 %v1160, %v1632
  %v1642 = vadd.f32 %v1119, %v1591
  %v1643 = vadd.f32 %v1121, %v1593
  %v1644 = vadd.f32 %v1162, %v1634
  %v1645 = vadd.f32 %v1164, %v1636
  %v1646 = vpack.c.bf16 %v218, %v214
  %v1647 = vpack.c.bf16 %v220, %v216
  %v1648 = vld [vmem:[%s2 + $0x600] sm:$0xff]
  %v1649 = vld [vmem:[%s2 + $0x608] sm:$0xff]
  %v1650 = vld [vmem:[%s2 + $0x610] sm:$0xff]
  %v1651 = vld [vmem:[%s2 + $0x618] sm:$0xff]
  %v1652 = vld [vmem:[%s2 + $0x620] sm:$0xff]
  %v1653 = vld [vmem:[%s2 + $0x628] sm:$0xff]
  %v1654 = vld [vmem:[%s2 + $0x630] sm:$0xff]
  %v1655 = vld [vmem:[%s2 + $0x638] sm:$0xff]
  %v1656 = vld [vmem:[%s2 + $0x640] sm:$0xff]
  %v1657 = vld [vmem:[%s2 + $0x648] sm:$0xff]
  %v1658 = vld [vmem:[%s2 + $0x650] sm:$0xff]
  %v1659 = vld [vmem:[%s2 + $0x658] sm:$0xff]
  %v1660 = vld [vmem:[%s2 + $0x660] sm:$0xff]
  %v1661 = vld [vmem:[%s2 + $0x668] sm:$0xff]
  %v1662 = vld [vmem:[%s2 + $0x670] sm:$0xff]
  %v1663 = vld [vmem:[%s2 + $0x678] sm:$0xff]
  %v1664 = vld [vmem:[%s2 + $0x680] sm:$0xff]
  %v1665 = vld [vmem:[%s2 + $0x688] sm:$0xff]
  %v1666 = vld [vmem:[%s2 + $0x690] sm:$0xff]
  %v1667 = vld [vmem:[%s2 + $0x698] sm:$0xff]
  %v1668 = vld [vmem:[%s2 + $0x6a0] sm:$0xff]
  %v1669 = vld [vmem:[%s2 + $0x6a8] sm:$0xff]
  %v1670 = vld [vmem:[%s2 + $0x6b0] sm:$0xff]
  %v1671 = vld [vmem:[%s2 + $0x6b8] sm:$0xff]
  %v1672 = vld [vmem:[%s2 + $0x6c0] sm:$0xff]
  %v1673 = vld [vmem:[%s2 + $0x6c8] sm:$0xff]
  %v1674 = vld [vmem:[%s2 + $0x6d0] sm:$0xff]
  %v1675 = vld [vmem:[%s2 + $0x6d8] sm:$0xff]
  %v1676 = vld [vmem:[%s2 + $0x6e0] sm:$0xff]
  %v1677 = vld [vmem:[%s2 + $0x6e8] sm:$0xff]
  %v1678 = vld [vmem:[%s2 + $0x6f0] sm:$0xff]
  %v1679 = vld [vmem:[%s2 + $0x6f8] sm:$0xff]
  %v1680 = vld [vmem:[%s2 + $0x700] sm:$0xff]
  %v1681 = vld [vmem:[%s2 + $0x708] sm:$0xff]
  %v1682 = vld [vmem:[%s2 + $0x710] sm:$0xff]
  %v1683 = vld [vmem:[%s2 + $0x718] sm:$0xff]
  %v1684 = vld [vmem:[%s2 + $0x720] sm:$0xff]
  %v1685 = vld [vmem:[%s2 + $0x728] sm:$0xff]
  %v1686 = vld [vmem:[%s2 + $0x730] sm:$0xff]
  %v1687 = vld [vmem:[%s2 + $0x738] sm:$0xff]
  %v1688 = vld [vmem:[%s2 + $0x740] sm:$0xff]
  %v1689 = vld [vmem:[%s2 + $0x748] sm:$0xff]
  %v1690 = vld [vmem:[%s2 + $0x750] sm:$0xff]
  %v1691 = vld [vmem:[%s2 + $0x758] sm:$0xff]
  %v1692 = vld [vmem:[%s2 + $0x760] sm:$0xff]
  %v1693 = vld [vmem:[%s2 + $0x768] sm:$0xff]
  %v1694 = vld [vmem:[%s2 + $0x770] sm:$0xff]
  %v1695 = vld [vmem:[%s2 + $0x778] sm:$0xff]
  %v1696 = vld [vmem:[%s2 + $0x780] sm:$0xff]
  %v1697 = vld [vmem:[%s2 + $0x788] sm:$0xff]
  %v1698 = vld [vmem:[%s2 + $0x790] sm:$0xff]
  %v1699 = vld [vmem:[%s2 + $0x798] sm:$0xff]
  %v1700 = vld [vmem:[%s2 + $0x7a0] sm:$0xff]
  %v1701 = vld [vmem:[%s2 + $0x7a8] sm:$0xff]
  %v1702 = vld [vmem:[%s2 + $0x7b0] sm:$0xff]
  %v1703 = vld [vmem:[%s2 + $0x7b8] sm:$0xff]
  %v1704 = vld [vmem:[%s2 + $0x7c0] sm:$0xff]
  %v1705 = vld [vmem:[%s2 + $0x7c8] sm:$0xff]
  %v1706 = vld [vmem:[%s2 + $0x7d0] sm:$0xff]
  %v1707 = vld [vmem:[%s2 + $0x7d8] sm:$0xff]
  %v1708 = vld [vmem:[%s2 + $0x7e0] sm:$0xff]
  %v1709 = vld [vmem:[%s2 + $0x7e8] sm:$0xff]
  %v1710 = vld [vmem:[%s2 + $0x7f0] sm:$0xff]
  %v1711 = vld [vmem:[%s2 + $0x7f8] sm:$0xff]
  %v1776 = vunpack.c.l.b16 %v1648
  %v1777 = vunpack.c.h.b16 %v1648
  %v1778 = vunpack.c.l.b16 %v1649
  %v1779 = vunpack.c.h.b16 %v1649
  %v1780 = vunpack.c.l.b16 %v1650
  %v1781 = vunpack.c.h.b16 %v1650
  %v1782 = vunpack.c.l.b16 %v1651
  %v1783 = vunpack.c.h.b16 %v1651
  %v1784 = vunpack.c.l.b16 %v1652
  %v1785 = vunpack.c.h.b16 %v1652
  %v1786 = vunpack.c.l.b16 %v1653
  %v1787 = vunpack.c.h.b16 %v1653
  %v1788 = vunpack.c.l.b16 %v1654
  %v1789 = vunpack.c.h.b16 %v1654
  %v1790 = vunpack.c.l.b16 %v1655
  %v1791 = vunpack.c.h.b16 %v1655
  %v1792 = vunpack.c.l.b16 %v1656
  %v1793 = vunpack.c.h.b16 %v1656
  %v1794 = vunpack.c.l.b16 %v1657
  %v1795 = vunpack.c.h.b16 %v1657
  %v1796 = vunpack.c.l.b16 %v1658
  %v1797 = vunpack.c.h.b16 %v1658
  %v1798 = vunpack.c.l.b16 %v1659
  %v1799 = vunpack.c.h.b16 %v1659
  %v1800 = vunpack.c.l.b16 %v1660
  %v1801 = vunpack.c.h.b16 %v1660
  %v1802 = vunpack.c.l.b16 %v1661
  %v1803 = vunpack.c.h.b16 %v1661
  %v1804 = vunpack.c.l.b16 %v1662
  %v1805 = vunpack.c.h.b16 %v1662
  %v1806 = vunpack.c.l.b16 %v1663
  %v1807 = vunpack.c.h.b16 %v1663
  %v1808 = vunpack.c.l.b16 %v1664
  %v1809 = vunpack.c.h.b16 %v1664
  %v1810 = vunpack.c.l.b16 %v1665
  %v1811 = vunpack.c.h.b16 %v1665
  %v1812 = vunpack.c.l.b16 %v1666
  %v1813 = vunpack.c.h.b16 %v1666
  %v1814 = vunpack.c.l.b16 %v1667
  %v1815 = vunpack.c.h.b16 %v1667
  %v1816 = vunpack.c.l.b16 %v1668
  %v1817 = vunpack.c.h.b16 %v1668
  %v1818 = vunpack.c.l.b16 %v1669
  %v1819 = vunpack.c.h.b16 %v1669
  %v1820 = vunpack.c.l.b16 %v1670
  %v1821 = vunpack.c.h.b16 %v1670
  %v1822 = vunpack.c.l.b16 %v1671
  %v1823 = vunpack.c.h.b16 %v1671
  %v1824 = vunpack.c.l.b16 %v1672
  %v1825 = vunpack.c.h.b16 %v1672
  %v1826 = vunpack.c.l.b16 %v1673
  %v1827 = vunpack.c.h.b16 %v1673
  %v1828 = vunpack.c.l.b16 %v1674
  %v1829 = vunpack.c.h.b16 %v1674
  %v1830 = vunpack.c.l.b16 %v1675
  %v1831 = vunpack.c.h.b16 %v1675
  %v1832 = vunpack.c.l.b16 %v1676
  %v1833 = vunpack.c.h.b16 %v1676
  %v1834 = vunpack.c.l.b16 %v1677
  %v1835 = vunpack.c.h.b16 %v1677
  %v1836 = vunpack.c.l.b16 %v1678
  %v1837 = vunpack.c.h.b16 %v1678
  %v1838 = vunpack.c.l.b16 %v1679
  %v1839 = vunpack.c.h.b16 %v1679
  %v1840 = vunpack.c.l.b16 %v1680
  %v1841 = vunpack.c.h.b16 %v1680
  %v1842 = vunpack.c.l.b16 %v1681
  %v1843 = vunpack.c.h.b16 %v1681
  %v1844 = vunpack.c.l.b16 %v1682
  %v1845 = vunpack.c.h.b16 %v1682
  %v1846 = vunpack.c.l.b16 %v1683
  %v1847 = vunpack.c.h.b16 %v1683
  %v1848 = vunpack.c.l.b16 %v1684
  %v1849 = vunpack.c.h.b16 %v1684
  %v1850 = vunpack.c.l.b16 %v1685
  %v1851 = vunpack.c.h.b16 %v1685
  %v1852 = vunpack.c.l.b16 %v1686
  %v1853 = vunpack.c.h.b16 %v1686
  %v1854 = vunpack.c.l.b16 %v1687
  %v1855 = vunpack.c.h.b16 %v1687
  %v1856 = vunpack.c.l.b16 %v1688
  %v1857 = vunpack.c.h.b16 %v1688
  %v1858 = vunpack.c.l.b16 %v1689
  %v1859 = vunpack.c.h.b16 %v1689
  %v1860 = vunpack.c.l.b16 %v1690
  %v1861 = vunpack.c.h.b16 %v1690
  %v1862 = vunpack.c.l.b16 %v1691
  %v1863 = vunpack.c.h.b16 %v1691
  %v1864 = vunpack.c.l.b16 %v1692
  %v1865 = vunpack.c.h.b16 %v1692
  %v1866 = vunpack.c.l.b16 %v1693
  %v1867 = vunpack.c.h.b16 %v1693
  %v1868 = vunpack.c.l.b16 %v1694
  %v1869 = vunpack.c.h.b16 %v1694
  %v1870 = vunpack.c.l.b16 %v1695
  %v1871 = vunpack.c.h.b16 %v1695
  %v1872 = vunpack.c.l.b16 %v1696
  %v1873 = vunpack.c.h.b16 %v1696
  %v1874 = vunpack.c.l.b16 %v1697
  %v1875 = vunpack.c.h.b16 %v1697
  %v1876 = vunpack.c.l.b16 %v1698
  %v1877 = vunpack.c.h.b16 %v1698
  %v1878 = vunpack.c.l.b16 %v1699
  %v1879 = vunpack.c.h.b16 %v1699
  %v1880 = vunpack.c.l.b16 %v1700
  %v1881 = vunpack.c.h.b16 %v1700
  %v1882 = vunpack.c.l.b16 %v1701
  %v1883 = vunpack.c.h.b16 %v1701
  %v1884 = vunpack.c.l.b16 %v1702
  %v1885 = vunpack.c.h.b16 %v1702
  %v1886 = vunpack.c.l.b16 %v1703
  %v1887 = vunpack.c.h.b16 %v1703
  %v1888 = vunpack.c.l.b16 %v1704
  %v1889 = vunpack.c.h.b16 %v1704
  %v1890 = vunpack.c.l.b16 %v1705
  %v1891 = vunpack.c.h.b16 %v1705
  %v1892 = vunpack.c.l.b16 %v1706
  %v1893 = vunpack.c.h.b16 %v1706
  %v1894 = vunpack.c.l.b16 %v1707
  %v1895 = vunpack.c.h.b16 %v1707
  %v1896 = vunpack.c.l.b16 %v1708
  %v1897 = vunpack.c.h.b16 %v1708
  %v1898 = vunpack.c.l.b16 %v1709
  %v1899 = vunpack.c.h.b16 %v1709
  %v1900 = vunpack.c.l.b16 %v1710
  %v1901 = vunpack.c.h.b16 %v1710
  %v1902 = vunpack.c.l.b16 %v1711
  %v1903 = vunpack.c.h.b16 %v1711
  %v1904 = vpack.c.b16 %v1780, %v1776
  %v1905 = vpack.c.b16 %v1781, %v1777
  %v1906 = vpack.c.b16 %v1782, %v1778
  %v1907 = vpack.c.b16 %v1783, %v1779
  %v1908 = vpack.c.b16 %v1788, %v1784
  %v1909 = vpack.c.b16 %v1789, %v1785
  %v1910 = vpack.c.b16 %v1790, %v1786
  %v1911 = vpack.c.b16 %v1791, %v1787
  %v1912 = vpack.c.b16 %v1796, %v1792
  %v1913 = vpack.c.b16 %v1797, %v1793
  %v1914 = vpack.c.b16 %v1798, %v1794
  %v1915 = vpack.c.b16 %v1799, %v1795
  %v1916 = vpack.c.b16 %v1804, %v1800
  %v1917 = vpack.c.b16 %v1805, %v1801
  %v1918 = vpack.c.b16 %v1806, %v1802
  %v1919 = vpack.c.b16 %v1807, %v1803
  %v1920 = vpack.c.b16 %v1812, %v1808
  %v1921 = vpack.c.b16 %v1813, %v1809
  %v1922 = vpack.c.b16 %v1814, %v1810
  %v1923 = vpack.c.b16 %v1815, %v1811
  %v1924 = vpack.c.b16 %v1820, %v1816
  %v1925 = vpack.c.b16 %v1821, %v1817
  %v1926 = vpack.c.b16 %v1822, %v1818
  %v1927 = vpack.c.b16 %v1823, %v1819
  %v1928 = vpack.c.b16 %v1828, %v1824
  %v1929 = vpack.c.b16 %v1829, %v1825
  %v1930 = vpack.c.b16 %v1830, %v1826
  %v1931 = vpack.c.b16 %v1831, %v1827
  %v1932 = vpack.c.b16 %v1836, %v1832
  %v1933 = vpack.c.b16 %v1837, %v1833
  %v1934 = vpack.c.b16 %v1838, %v1834
  %v1935 = vpack.c.b16 %v1839, %v1835
  %v1936 = vpack.c.b16 %v1844, %v1840
  %v1937 = vpack.c.b16 %v1845, %v1841
  %v1938 = vpack.c.b16 %v1846, %v1842
  %v1939 = vpack.c.b16 %v1847, %v1843
  %v1940 = vpack.c.b16 %v1852, %v1848
  %v1941 = vpack.c.b16 %v1853, %v1849
  %v1942 = vpack.c.b16 %v1854, %v1850
  %v1943 = vpack.c.b16 %v1855, %v1851
  %v1944 = vpack.c.b16 %v1860, %v1856
  %v1945 = vpack.c.b16 %v1861, %v1857
  %v1946 = vpack.c.b16 %v1862, %v1858
  %v1947 = vpack.c.b16 %v1863, %v1859
  %v1948 = vpack.c.b16 %v1868, %v1864
  %v1949 = vpack.c.b16 %v1869, %v1865
  %v1950 = vpack.c.b16 %v1870, %v1866
  %v1951 = vpack.c.b16 %v1871, %v1867
  %v1952 = vpack.c.b16 %v1876, %v1872
  %v1953 = vpack.c.b16 %v1877, %v1873
  %v1954 = vpack.c.b16 %v1878, %v1874
  %v1955 = vpack.c.b16 %v1879, %v1875
  %v1956 = vpack.c.b16 %v1884, %v1880
  %v1957 = vpack.c.b16 %v1885, %v1881
  %v1958 = vpack.c.b16 %v1886, %v1882
  %v1959 = vpack.c.b16 %v1887, %v1883
  %v1960 = vpack.c.b16 %v1892, %v1888
  %v1961 = vpack.c.b16 %v1893, %v1889
  %v1962 = vpack.c.b16 %v1894, %v1890
  %v1963 = vpack.c.b16 %v1895, %v1891
  %v1964 = vpack.c.b16 %v1900, %v1896
  %v1965 = vpack.c.b16 %v1901, %v1897
  %v1966 = vpack.c.b16 %v1902, %v1898
  %v1967 = vpack.c.b16 %v1903, %v1899
  %2032 = vmatprep.subr.bf16.mxu0 %v1933
  %2033 = vmatpush1.bf16.msra.mxu0 %v1932
  %2034 = vmatprep.subr.bf16.mxu0 %v1929
  %2035 = vmatpush1.bf16.msra.mxu0 %v1928
  %2036 = vmatprep.subr.bf16.mxu0 %v1925
  %2037 = vmatpush1.bf16.msra.mxu0 %v1924
  %2038 = vmatprep.subr.bf16.mxu0 %v1921
  %2039 = vmatpush1.bf16.msra.mxu0 %v1920
  %2040 = vmatprep.subr.bf16.mxu0 %v1917
  %2041 = vmatpush1.bf16.msra.mxu0 %v1916
  %2042 = vmatprep.subr.bf16.mxu0 %v1913
  %2043 = vmatpush1.bf16.msra.mxu0 %v1912
  %2044 = vmatprep.subr.bf16.mxu0 %v1909
  %2045 = vmatpush1.bf16.msra.mxu0 %v1908
  %2046 = vmatprep.subr.bf16.mxu0 %v1905
  %2047 = vmatpush1.bf16.msra.mxu0 %v1904
  %2048 = vmatprep.subr.bf16.mxu0 %v1965
  %2049 = vmatpush2.bf16.msra.mxu0 %v1964
  %2050 = vmatprep.subr.bf16.mxu0 %v1961
  %2051 = vmatpush2.bf16.msra.mxu0 %v1960
  %2052 = vmatprep.subr.bf16.mxu0 %v1957
  %2053 = vmatpush2.bf16.msra.mxu0 %v1956
  %2054 = vmatprep.subr.bf16.mxu0 %v1953
  %2055 = vmatpush2.bf16.msra.mxu0 %v1952
  %2056 = vmatprep.subr.bf16.mxu0 %v1949
  %2057 = vmatpush2.bf16.msra.mxu0 %v1948
  %2058 = vmatprep.subr.bf16.mxu0 %v1945
  %2059 = vmatpush2.bf16.msra.mxu0 %v1944
  %2060 = vmatprep.subr.bf16.mxu0 %v1941
  %2061 = vmatpush2.bf16.msra.mxu0 %v1940
  %2062 = vmatprep.subr.bf16.mxu0 %v1937
  %2063 = vmatpush2.bf16.msra.mxu0 %v1936
  %2064 = vmatprep.mubr.bf16.mxu0 %v1647
  %2065 = vmatmul.mubr.bf16.gmra.mxu0 %v1646
  %v2066 = vpop.f32.mrf.mxu0
  %v2067 = vadd.f32 0.0, %v2066
  %v2068 = vpop.f32.mrf.mxu0
  %v2069 = vadd.f32 0.0, %v2068
  %v2070 = vpop.f32.mrf.mxu0
  %v2071 = vadd.f32 0.0, %v2070
  %v2072 = vpop.f32.mrf.mxu0
  %v2073 = vadd.f32 0.0, %v2072
  %2074 = vdwg.mxu0
  %2075 = vmatprep.subr.bf16.mxu0 %v1935
  %2076 = vmatpush1.bf16.msra.mxu0 %v1934
  %2077 = vmatprep.subr.bf16.mxu0 %v1931
  %2078 = vmatpush1.bf16.msra.mxu0 %v1930
  %2079 = vmatprep.subr.bf16.mxu0 %v1927
  %2080 = vmatpush1.bf16.msra.mxu0 %v1926
  %2081 = vmatprep.subr.bf16.mxu0 %v1923
  %2082 = vmatpush1.bf16.msra.mxu0 %v1922
  %2083 = vmatprep.subr.bf16.mxu0 %v1919
  %2084 = vmatpush1.bf16.msra.mxu0 %v1918
  %2085 = vmatprep.subr.bf16.mxu0 %v1915
  %2086 = vmatpush1.bf16.msra.mxu0 %v1914
  %2087 = vmatprep.subr.bf16.mxu0 %v1911
  %2088 = vmatpush1.bf16.msra.mxu0 %v1910
  %2089 = vmatprep.subr.bf16.mxu0 %v1907
  %2090 = vmatpush1.bf16.msra.mxu0 %v1906
  %2091 = vmatprep.subr.bf16.mxu0 %v1967
  %2092 = vmatpush2.bf16.msra.mxu0 %v1966
  %2093 = vmatprep.subr.bf16.mxu0 %v1963
  %2094 = vmatpush2.bf16.msra.mxu0 %v1962
  %2095 = vmatprep.subr.bf16.mxu0 %v1959
  %2096 = vmatpush2.bf16.msra.mxu0 %v1958
  %2097 = vmatprep.subr.bf16.mxu0 %v1955
  %2098 = vmatpush2.bf16.msra.mxu0 %v1954
  %2099 = vmatprep.subr.bf16.mxu0 %v1951
  %2100 = vmatpush2.bf16.msra.mxu0 %v1950
  %2101 = vmatprep.subr.bf16.mxu0 %v1947
  %2102 = vmatpush2.bf16.msra.mxu0 %v1946
  %2103 = vmatprep.subr.bf16.mxu0 %v1943
  %2104 = vmatpush2.bf16.msra.mxu0 %v1942
  %2105 = vmatprep.subr.bf16.mxu0 %v1939
  %2106 = vmatpush2.bf16.msra.mxu0 %v1938
  %2107 = vmatprep.mubr.bf16.mxu0 %v1647
  %2108 = vmatmul.mubr.bf16.gmra.mxu0 %v1646
  %v2109 = vpop.f32.mrf.mxu0
  %v2110 = vadd.f32 0.0, %v2109
  %v2111 = vpop.f32.mrf.mxu0
  %v2112 = vadd.f32 0.0, %v2111
  %v2113 = vpop.f32.mrf.mxu0
  %v2114 = vadd.f32 0.0, %v2113
  %v2115 = vpop.f32.mrf.mxu0
  %v2116 = vadd.f32 0.0, %v2115
  %2117 = vdwg.mxu0
  %v2118 = vadd.f32 %v1638, %v2067
  %v2119 = vadd.f32 %v1639, %v2069
  %v2120 = vadd.f32 %v1640, %v2110
  %v2121 = vadd.f32 %v1641, %v2112
  %v2122 = vadd.f32 %v1642, %v2071
  %v2123 = vadd.f32 %v1643, %v2073
  %v2124 = vadd.f32 %v1644, %v2114
  %v2125 = vadd.f32 %v1645, %v2116
  %v2126 = vmax.f32 %v2118, 0.0
  %v2127 = vmax.f32 %v2119, 0.0
  %v2128 = vmax.f32 %v2120, 0.0
  %v2129 = vmax.f32 %v2121, 0.0
  %v2130 = vmax.f32 %v2122, 0.0
  %v2131 = vmax.f32 %v2123, 0.0
  %v2132 = vmax.f32 %v2124, 0.0
  %v2133 = vmax.f32 %v2125, 0.0
  %v2134 = vpack.c.bf16 %v2130, %v2126
  %v2135 = vpack.c.bf16 %v2131, %v2127
  %v2136 = vpack.c.bf16 %v2132, %v2128
  %v2137 = vpack.c.bf16 %v2133, %v2129
  %v2138 = vld [vmem:[%s3] sm:$0xff]
  %v2139 = vld [vmem:[%s3 + $0x8] sm:$0xff]
  %v2140 = vld [vmem:[%s3 + $0x10] sm:$0xff]
  %v2141 = vld [vmem:[%s3 + $0x18] sm:$0xff]
  %v2142 = vld [vmem:[%s3 + $0x20] sm:$0xff]
  %v2143 = vld [vmem:[%s3 + $0x28] sm:$0xff]
  %v2144 = vld [vmem:[%s3 + $0x30] sm:$0xff]
  %v2145 = vld [vmem:[%s3 + $0x38] sm:$0xff]
  %v2146 = vld [vmem:[%s3 + $0x40] sm:$0xff]
  %v2147 = vld [vmem:[%s3 + $0x48] sm:$0xff]
  %v2148 = vld [vmem:[%s3 + $0x50] sm:$0xff]
  %v2149 = vld [vmem:[%s3 + $0x58] sm:$0xff]
  %v2150 = vld [vmem:[%s3 + $0x60] sm:$0xff]
  %v2151 = vld [vmem:[%s3 + $0x68] sm:$0xff]
  %v2152 = vld [vmem:[%s3 + $0x70] sm:$0xff]
  %v2153 = vld [vmem:[%s3 + $0x78] sm:$0xff]
  %v2154 = vld [vmem:[%s3 + $0x80] sm:$0xff]
  %v2155 = vld [vmem:[%s3 + $0x88] sm:$0xff]
  %v2156 = vld [vmem:[%s3 + $0x90] sm:$0xff]
  %v2157 = vld [vmem:[%s3 + $0x98] sm:$0xff]
  %v2158 = vld [vmem:[%s3 + $0xa0] sm:$0xff]
  %v2159 = vld [vmem:[%s3 + $0xa8] sm:$0xff]
  %v2160 = vld [vmem:[%s3 + $0xb0] sm:$0xff]
  %v2161 = vld [vmem:[%s3 + $0xb8] sm:$0xff]
  %v2162 = vld [vmem:[%s3 + $0xc0] sm:$0xff]
  %v2163 = vld [vmem:[%s3 + $0xc8] sm:$0xff]
  %v2164 = vld [vmem:[%s3 + $0xd0] sm:$0xff]
  %v2165 = vld [vmem:[%s3 + $0xd8] sm:$0xff]
  %v2166 = vld [vmem:[%s3 + $0xe0] sm:$0xff]
  %v2167 = vld [vmem:[%s3 + $0xe8] sm:$0xff]
  %v2168 = vld [vmem:[%s3 + $0xf0] sm:$0xff]
  %v2169 = vld [vmem:[%s3 + $0xf8] sm:$0xff]
  %v2170 = vld [vmem:[%s3 + $0x100] sm:$0xff]
  %v2171 = vld [vmem:[%s3 + $0x108] sm:$0xff]
  %v2172 = vld [vmem:[%s3 + $0x110] sm:$0xff]
  %v2173 = vld [vmem:[%s3 + $0x118] sm:$0xff]
  %v2174 = vld [vmem:[%s3 + $0x120] sm:$0xff]
  %v2175 = vld [vmem:[%s3 + $0x128] sm:$0xff]
  %v2176 = vld [vmem:[%s3 + $0x130] sm:$0xff]
  %v2177 = vld [vmem:[%s3 + $0x138] sm:$0xff]
  %v2178 = vld [vmem:[%s3 + $0x140] sm:$0xff]
  %v2179 = vld [vmem:[%s3 + $0x148] sm:$0xff]
  %v2180 = vld [vmem:[%s3 + $0x150] sm:$0xff]
  %v2181 = vld [vmem:[%s3 + $0x158] sm:$0xff]
  %v2182 = vld [vmem:[%s3 + $0x160] sm:$0xff]
  %v2183 = vld [vmem:[%s3 + $0x168] sm:$0xff]
  %v2184 = vld [vmem:[%s3 + $0x170] sm:$0xff]
  %v2185 = vld [vmem:[%s3 + $0x178] sm:$0xff]
  %v2186 = vld [vmem:[%s3 + $0x180] sm:$0xff]
  %v2187 = vld [vmem:[%s3 + $0x188] sm:$0xff]
  %v2188 = vld [vmem:[%s3 + $0x190] sm:$0xff]
  %v2189 = vld [vmem:[%s3 + $0x198] sm:$0xff]
  %v2190 = vld [vmem:[%s3 + $0x1a0] sm:$0xff]
  %v2191 = vld [vmem:[%s3 + $0x1a8] sm:$0xff]
  %v2192 = vld [vmem:[%s3 + $0x1b0] sm:$0xff]
  %v2193 = vld [vmem:[%s3 + $0x1b8] sm:$0xff]
  %v2194 = vld [vmem:[%s3 + $0x1c0] sm:$0xff]
  %v2195 = vld [vmem:[%s3 + $0x1c8] sm:$0xff]
  %v2196 = vld [vmem:[%s3 + $0x1d0] sm:$0xff]
  %v2197 = vld [vmem:[%s3 + $0x1d8] sm:$0xff]
  %v2198 = vld [vmem:[%s3 + $0x1e0] sm:$0xff]
  %v2199 = vld [vmem:[%s3 + $0x1e8] sm:$0xff]
  %v2200 = vld [vmem:[%s3 + $0x1f0] sm:$0xff]
  %v2201 = vld [vmem:[%s3 + $0x1f8] sm:$0xff]
  %v2202 = vld [vmem:[%s3 + $0x200] sm:$0xff]
  %v2203 = vld [vmem:[%s3 + $0x208] sm:$0xff]
  %v2204 = vld [vmem:[%s3 + $0x210] sm:$0xff]
  %v2205 = vld [vmem:[%s3 + $0x218] sm:$0xff]
  %v2206 = vld [vmem:[%s3 + $0x220] sm:$0xff]
  %v2207 = vld [vmem:[%s3 + $0x228] sm:$0xff]
  %v2208 = vld [vmem:[%s3 + $0x230] sm:$0xff]
  %v2209 = vld [vmem:[%s3 + $0x238] sm:$0xff]
  %v2210 = vld [vmem:[%s3 + $0x240] sm:$0xff]
  %v2211 = vld [vmem:[%s3 + $0x248] sm:$0xff]
  %v2212 = vld [vmem:[%s3 + $0x250] sm:$0xff]
  %v2213 = vld [vmem:[%s3 + $0x258] sm:$0xff]
  %v2214 = vld [vmem:[%s3 + $0x260] sm:$0xff]
  %v2215 = vld [vmem:[%s3 + $0x268] sm:$0xff]
  %v2216 = vld [vmem:[%s3 + $0x270] sm:$0xff]
  %v2217 = vld [vmem:[%s3 + $0x278] sm:$0xff]
  %v2218 = vld [vmem:[%s3 + $0x280] sm:$0xff]
  %v2219 = vld [vmem:[%s3 + $0x288] sm:$0xff]
  %v2220 = vld [vmem:[%s3 + $0x290] sm:$0xff]
  %v2221 = vld [vmem:[%s3 + $0x298] sm:$0xff]
  %v2222 = vld [vmem:[%s3 + $0x2a0] sm:$0xff]
  %v2223 = vld [vmem:[%s3 + $0x2a8] sm:$0xff]
  %v2224 = vld [vmem:[%s3 + $0x2b0] sm:$0xff]
  %v2225 = vld [vmem:[%s3 + $0x2b8] sm:$0xff]
  %v2226 = vld [vmem:[%s3 + $0x2c0] sm:$0xff]
  %v2227 = vld [vmem:[%s3 + $0x2c8] sm:$0xff]
  %v2228 = vld [vmem:[%s3 + $0x2d0] sm:$0xff]
  %v2229 = vld [vmem:[%s3 + $0x2d8] sm:$0xff]
  %v2230 = vld [vmem:[%s3 + $0x2e0] sm:$0xff]
  %v2231 = vld [vmem:[%s3 + $0x2e8] sm:$0xff]
  %v2232 = vld [vmem:[%s3 + $0x2f0] sm:$0xff]
  %v2233 = vld [vmem:[%s3 + $0x2f8] sm:$0xff]
  %v2234 = vld [vmem:[%s3 + $0x300] sm:$0xff]
  %v2235 = vld [vmem:[%s3 + $0x308] sm:$0xff]
  %v2236 = vld [vmem:[%s3 + $0x310] sm:$0xff]
  %v2237 = vld [vmem:[%s3 + $0x318] sm:$0xff]
  %v2238 = vld [vmem:[%s3 + $0x320] sm:$0xff]
  %v2239 = vld [vmem:[%s3 + $0x328] sm:$0xff]
  %v2240 = vld [vmem:[%s3 + $0x330] sm:$0xff]
  %v2241 = vld [vmem:[%s3 + $0x338] sm:$0xff]
  %v2242 = vld [vmem:[%s3 + $0x340] sm:$0xff]
  %v2243 = vld [vmem:[%s3 + $0x348] sm:$0xff]
  %v2244 = vld [vmem:[%s3 + $0x350] sm:$0xff]
  %v2245 = vld [vmem:[%s3 + $0x358] sm:$0xff]
  %v2246 = vld [vmem:[%s3 + $0x360] sm:$0xff]
  %v2247 = vld [vmem:[%s3 + $0x368] sm:$0xff]
  %v2248 = vld [vmem:[%s3 + $0x370] sm:$0xff]
  %v2249 = vld [vmem:[%s3 + $0x378] sm:$0xff]
  %v2250 = vld [vmem:[%s3 + $0x380] sm:$0xff]
  %v2251 = vld [vmem:[%s3 + $0x388] sm:$0xff]
  %v2252 = vld [vmem:[%s3 + $0x390] sm:$0xff]
  %v2253 = vld [vmem:[%s3 + $0x398] sm:$0xff]
  %v2254 = vld [vmem:[%s3 + $0x3a0] sm:$0xff]
  %v2255 = vld [vmem:[%s3 + $0x3a8] sm:$0xff]
  %v2256 = vld [vmem:[%s3 + $0x3b0] sm:$0xff]
  %v2257 = vld [vmem:[%s3 + $0x3b8] sm:$0xff]
  %v2258 = vld [vmem:[%s3 + $0x3c0] sm:$0xff]
  %v2259 = vld [vmem:[%s3 + $0x3c8] sm:$0xff]
  %v2260 = vld [vmem:[%s3 + $0x3d0] sm:$0xff]
  %v2261 = vld [vmem:[%s3 + $0x3d8] sm:$0xff]
  %v2262 = vld [vmem:[%s3 + $0x3e0] sm:$0xff]
  %v2263 = vld [vmem:[%s3 + $0x3e8] sm:$0xff]
  %v2264 = vld [vmem:[%s3 + $0x3f0] sm:$0xff]
  %v2265 = vld [vmem:[%s3 + $0x3f8] sm:$0xff]
  %v2394 = vunpack.c.l.b16 %v2138
  %v2395 = vunpack.c.h.b16 %v2138
  %v2396 = vunpack.c.l.b16 %v2139
  %v2397 = vunpack.c.h.b16 %v2139
  %v2398 = vunpack.c.l.b16 %v2140
  %v2399 = vunpack.c.h.b16 %v2140
  %v2400 = vunpack.c.l.b16 %v2141
  %v2401 = vunpack.c.h.b16 %v2141
  %v2402 = vunpack.c.l.b16 %v2142
  %v2403 = vunpack.c.h.b16 %v2142
  %v2404 = vunpack.c.l.b16 %v2143
  %v2405 = vunpack.c.h.b16 %v2143
  %v2406 = vunpack.c.l.b16 %v2144
  %v2407 = vunpack.c.h.b16 %v2144
  %v2408 = vunpack.c.l.b16 %v2145
  %v2409 = vunpack.c.h.b16 %v2145
  %v2410 = vunpack.c.l.b16 %v2146
  %v2411 = vunpack.c.h.b16 %v2146
  %v2412 = vunpack.c.l.b16 %v2147
  %v2413 = vunpack.c.h.b16 %v2147
  %v2414 = vunpack.c.l.b16 %v2148
  %v2415 = vunpack.c.h.b16 %v2148
  %v2416 = vunpack.c.l.b16 %v2149
  %v2417 = vunpack.c.h.b16 %v2149
  %v2418 = vunpack.c.l.b16 %v2150
  %v2419 = vunpack.c.h.b16 %v2150
  %v2420 = vunpack.c.l.b16 %v2151
  %v2421 = vunpack.c.h.b16 %v2151
  %v2422 = vunpack.c.l.b16 %v2152
  %v2423 = vunpack.c.h.b16 %v2152
  %v2424 = vunpack.c.l.b16 %v2153
  %v2425 = vunpack.c.h.b16 %v2153
  %v2426 = vunpack.c.l.b16 %v2154
  %v2427 = vunpack.c.h.b16 %v2154
  %v2428 = vunpack.c.l.b16 %v2155
  %v2429 = vunpack.c.h.b16 %v2155
  %v2430 = vunpack.c.l.b16 %v2156
  %v2431 = vunpack.c.h.b16 %v2156
  %v2432 = vunpack.c.l.b16 %v2157
  %v2433 = vunpack.c.h.b16 %v2157
  %v2434 = vunpack.c.l.b16 %v2158
  %v2435 = vunpack.c.h.b16 %v2158
  %v2436 = vunpack.c.l.b16 %v2159
  %v2437 = vunpack.c.h.b16 %v2159
  %v2438 = vunpack.c.l.b16 %v2160
  %v2439 = vunpack.c.h.b16 %v2160
  %v2440 = vunpack.c.l.b16 %v2161
  %v2441 = vunpack.c.h.b16 %v2161
  %v2442 = vunpack.c.l.b16 %v2162
  %v2443 = vunpack.c.h.b16 %v2162
  %v2444 = vunpack.c.l.b16 %v2163
  %v2445 = vunpack.c.h.b16 %v2163
  %v2446 = vunpack.c.l.b16 %v2164
  %v2447 = vunpack.c.h.b16 %v2164
  %v2448 = vunpack.c.l.b16 %v2165
  %v2449 = vunpack.c.h.b16 %v2165
  %v2450 = vunpack.c.l.b16 %v2166
  %v2451 = vunpack.c.h.b16 %v2166
  %v2452 = vunpack.c.l.b16 %v2167
  %v2453 = vunpack.c.h.b16 %v2167
  %v2454 = vunpack.c.l.b16 %v2168
  %v2455 = vunpack.c.h.b16 %v2168
  %v2456 = vunpack.c.l.b16 %v2169
  %v2457 = vunpack.c.h.b16 %v2169
  %v2458 = vunpack.c.l.b16 %v2170
  %v2459 = vunpack.c.h.b16 %v2170
  %v2460 = vunpack.c.l.b16 %v2171
  %v2461 = vunpack.c.h.b16 %v2171
  %v2462 = vunpack.c.l.b16 %v2172
  %v2463 = vunpack.c.h.b16 %v2172
  %v2464 = vunpack.c.l.b16 %v2173
  %v2465 = vunpack.c.h.b16 %v2173
  %v2466 = vunpack.c.l.b16 %v2174
  %v2467 = vunpack.c.h.b16 %v2174
  %v2468 = vunpack.c.l.b16 %v2175
  %v2469 = vunpack.c.h.b16 %v2175
  %v2470 = vunpack.c.l.b16 %v2176
  %v2471 = vunpack.c.h.b16 %v2176
  %v2472 = vunpack.c.l.b16 %v2177
  %v2473 = vunpack.c.h.b16 %v2177
  %v2474 = vunpack.c.l.b16 %v2178
  %v2475 = vunpack.c.h.b16 %v2178
  %v2476 = vunpack.c.l.b16 %v2179
  %v2477 = vunpack.c.h.b16 %v2179
  %v2478 = vunpack.c.l.b16 %v2180
  %v2479 = vunpack.c.h.b16 %v2180
  %v2480 = vunpack.c.l.b16 %v2181
  %v2481 = vunpack.c.h.b16 %v2181
  %v2482 = vunpack.c.l.b16 %v2182
  %v2483 = vunpack.c.h.b16 %v2182
  %v2484 = vunpack.c.l.b16 %v2183
  %v2485 = vunpack.c.h.b16 %v2183
  %v2486 = vunpack.c.l.b16 %v2184
  %v2487 = vunpack.c.h.b16 %v2184
  %v2488 = vunpack.c.l.b16 %v2185
  %v2489 = vunpack.c.h.b16 %v2185
  %v2490 = vunpack.c.l.b16 %v2186
  %v2491 = vunpack.c.h.b16 %v2186
  %v2492 = vunpack.c.l.b16 %v2187
  %v2493 = vunpack.c.h.b16 %v2187
  %v2494 = vunpack.c.l.b16 %v2188
  %v2495 = vunpack.c.h.b16 %v2188
  %v2496 = vunpack.c.l.b16 %v2189
  %v2497 = vunpack.c.h.b16 %v2189
  %v2498 = vunpack.c.l.b16 %v2190
  %v2499 = vunpack.c.h.b16 %v2190
  %v2500 = vunpack.c.l.b16 %v2191
  %v2501 = vunpack.c.h.b16 %v2191
  %v2502 = vunpack.c.l.b16 %v2192
  %v2503 = vunpack.c.h.b16 %v2192
  %v2504 = vunpack.c.l.b16 %v2193
  %v2505 = vunpack.c.h.b16 %v2193
  %v2506 = vunpack.c.l.b16 %v2194
  %v2507 = vunpack.c.h.b16 %v2194
  %v2508 = vunpack.c.l.b16 %v2195
  %v2509 = vunpack.c.h.b16 %v2195
  %v2510 = vunpack.c.l.b16 %v2196
  %v2511 = vunpack.c.h.b16 %v2196
  %v2512 = vunpack.c.l.b16 %v2197
  %v2513 = vunpack.c.h.b16 %v2197
  %v2514 = vunpack.c.l.b16 %v2198
  %v2515 = vunpack.c.h.b16 %v2198
  %v2516 = vunpack.c.l.b16 %v2199
  %v2517 = vunpack.c.h.b16 %v2199
  %v2518 = vunpack.c.l.b16 %v2200
  %v2519 = vunpack.c.h.b16 %v2200
  %v2520 = vunpack.c.l.b16 %v2201
  %v2521 = vunpack.c.h.b16 %v2201
  %v2522 = vunpack.c.l.b16 %v2202
  %v2523 = vunpack.c.h.b16 %v2202
  %v2524 = vunpack.c.l.b16 %v2203
  %v2525 = vunpack.c.h.b16 %v2203
  %v2526 = vunpack.c.l.b16 %v2204
  %v2527 = vunpack.c.h.b16 %v2204
  %v2528 = vunpack.c.l.b16 %v2205
  %v2529 = vunpack.c.h.b16 %v2205
  %v2530 = vunpack.c.l.b16 %v2206
  %v2531 = vunpack.c.h.b16 %v2206
  %v2532 = vunpack.c.l.b16 %v2207
  %v2533 = vunpack.c.h.b16 %v2207
  %v2534 = vunpack.c.l.b16 %v2208
  %v2535 = vunpack.c.h.b16 %v2208
  %v2536 = vunpack.c.l.b16 %v2209
  %v2537 = vunpack.c.h.b16 %v2209
  %v2538 = vunpack.c.l.b16 %v2210
  %v2539 = vunpack.c.h.b16 %v2210
  %v2540 = vunpack.c.l.b16 %v2211
  %v2541 = vunpack.c.h.b16 %v2211
  %v2542 = vunpack.c.l.b16 %v2212
  %v2543 = vunpack.c.h.b16 %v2212
  %v2544 = vunpack.c.l.b16 %v2213
  %v2545 = vunpack.c.h.b16 %v2213
  %v2546 = vunpack.c.l.b16 %v2214
  %v2547 = vunpack.c.h.b16 %v2214
  %v2548 = vunpack.c.l.b16 %v2215
  %v2549 = vunpack.c.h.b16 %v2215
  %v2550 = vunpack.c.l.b16 %v2216
  %v2551 = vunpack.c.h.b16 %v2216
  %v2552 = vunpack.c.l.b16 %v2217
  %v2553 = vunpack.c.h.b16 %v2217
  %v2554 = vunpack.c.l.b16 %v2218
  %v2555 = vunpack.c.h.b16 %v2218
  %v2556 = vunpack.c.l.b16 %v2219
  %v2557 = vunpack.c.h.b16 %v2219
  %v2558 = vunpack.c.l.b16 %v2220
  %v2559 = vunpack.c.h.b16 %v2220
  %v2560 = vunpack.c.l.b16 %v2221
  %v2561 = vunpack.c.h.b16 %v2221
  %v2562 = vunpack.c.l.b16 %v2222
  %v2563 = vunpack.c.h.b16 %v2222
  %v2564 = vunpack.c.l.b16 %v2223
  %v2565 = vunpack.c.h.b16 %v2223
  %v2566 = vunpack.c.l.b16 %v2224
  %v2567 = vunpack.c.h.b16 %v2224
  %v2568 = vunpack.c.l.b16 %v2225
  %v2569 = vunpack.c.h.b16 %v2225
  %v2570 = vunpack.c.l.b16 %v2226
  %v2571 = vunpack.c.h.b16 %v2226
  %v2572 = vunpack.c.l.b16 %v2227
  %v2573 = vunpack.c.h.b16 %v2227
  %v2574 = vunpack.c.l.b16 %v2228
  %v2575 = vunpack.c.h.b16 %v2228
  %v2576 = vunpack.c.l.b16 %v2229
  %v2577 = vunpack.c.h.b16 %v2229
  %v2578 = vunpack.c.l.b16 %v2230
  %v2579 = vunpack.c.h.b16 %v2230
  %v2580 = vunpack.c.l.b16 %v2231
  %v2581 = vunpack.c.h.b16 %v2231
  %v2582 = vunpack.c.l.b16 %v2232
  %v2583 = vunpack.c.h.b16 %v2232
  %v2584 = vunpack.c.l.b16 %v2233
  %v2585 = vunpack.c.h.b16 %v2233
  %v2586 = vunpack.c.l.b16 %v2234
  %v2587 = vunpack.c.h.b16 %v2234
  %v2588 = vunpack.c.l.b16 %v2235
  %v2589 = vunpack.c.h.b16 %v2235
  %v2590 = vunpack.c.l.b16 %v2236
  %v2591 = vunpack.c.h.b16 %v2236
  %v2592 = vunpack.c.l.b16 %v2237
  %v2593 = vunpack.c.h.b16 %v2237
  %v2594 = vunpack.c.l.b16 %v2238
  %v2595 = vunpack.c.h.b16 %v2238
  %v2596 = vunpack.c.l.b16 %v2239
  %v2597 = vunpack.c.h.b16 %v2239
  %v2598 = vunpack.c.l.b16 %v2240
  %v2599 = vunpack.c.h.b16 %v2240
  %v2600 = vunpack.c.l.b16 %v2241
  %v2601 = vunpack.c.h.b16 %v2241
  %v2602 = vunpack.c.l.b16 %v2242
  %v2603 = vunpack.c.h.b16 %v2242
  %v2604 = vunpack.c.l.b16 %v2243
  %v2605 = vunpack.c.h.b16 %v2243
  %v2606 = vunpack.c.l.b16 %v2244
  %v2607 = vunpack.c.h.b16 %v2244
  %v2608 = vunpack.c.l.b16 %v2245
  %v2609 = vunpack.c.h.b16 %v2245
  %v2610 = vunpack.c.l.b16 %v2246
  %v2611 = vunpack.c.h.b16 %v2246
  %v2612 = vunpack.c.l.b16 %v2247
  %v2613 = vunpack.c.h.b16 %v2247
  %v2614 = vunpack.c.l.b16 %v2248
  %v2615 = vunpack.c.h.b16 %v2248
  %v2616 = vunpack.c.l.b16 %v2249
  %v2617 = vunpack.c.h.b16 %v2249
  %v2618 = vunpack.c.l.b16 %v2250
  %v2619 = vunpack.c.h.b16 %v2250
  %v2620 = vunpack.c.l.b16 %v2251
  %v2621 = vunpack.c.h.b16 %v2251
  %v2622 = vunpack.c.l.b16 %v2252
  %v2623 = vunpack.c.h.b16 %v2252
  %v2624 = vunpack.c.l.b16 %v2253
  %v2625 = vunpack.c.h.b16 %v2253
  %v2626 = vunpack.c.l.b16 %v2254
  %v2627 = vunpack.c.h.b16 %v2254
  %v2628 = vunpack.c.l.b16 %v2255
  %v2629 = vunpack.c.h.b16 %v2255
  %v2630 = vunpack.c.l.b16 %v2256
  %v2631 = vunpack.c.h.b16 %v2256
  %v2632 = vunpack.c.l.b16 %v2257
  %v2633 = vunpack.c.h.b16 %v2257
  %v2634 = vunpack.c.l.b16 %v2258
  %v2635 = vunpack.c.h.b16 %v2258
  %v2636 = vunpack.c.l.b16 %v2259
  %v2637 = vunpack.c.h.b16 %v2259
  %v2638 = vunpack.c.l.b16 %v2260
  %v2639 = vunpack.c.h.b16 %v2260
  %v2640 = vunpack.c.l.b16 %v2261
  %v2641 = vunpack.c.h.b16 %v2261
  %v2642 = vunpack.c.l.b16 %v2262
  %v2643 = vunpack.c.h.b16 %v2262
  %v2644 = vunpack.c.l.b16 %v2263
  %v2645 = vunpack.c.h.b16 %v2263
  %v2646 = vunpack.c.l.b16 %v2264
  %v2647 = vunpack.c.h.b16 %v2264
  %v2648 = vunpack.c.l.b16 %v2265
  %v2649 = vunpack.c.h.b16 %v2265
  %v2650 = vpack.c.b16 %v2398, %v2394
  %v2651 = vpack.c.b16 %v2399, %v2395
  %v2652 = vpack.c.b16 %v2400, %v2396
  %v2653 = vpack.c.b16 %v2401, %v2397
  %v2654 = vpack.c.b16 %v2406, %v2402
  %v2655 = vpack.c.b16 %v2407, %v2403
  %v2656 = vpack.c.b16 %v2408, %v2404
  %v2657 = vpack.c.b16 %v2409, %v2405
  %v2658 = vpack.c.b16 %v2414, %v2410
  %v2659 = vpack.c.b16 %v2415, %v2411
  %v2660 = vpack.c.b16 %v2416, %v2412
  %v2661 = vpack.c.b16 %v2417, %v2413
  %v2662 = vpack.c.b16 %v2422, %v2418
  %v2663 = vpack.c.b16 %v2423, %v2419
  %v2664 = vpack.c.b16 %v2424, %v2420
  %v2665 = vpack.c.b16 %v2425, %v2421
  %v2666 = vpack.c.b16 %v2430, %v2426
  %v2667 = vpack.c.b16 %v2431, %v2427
  %v2668 = vpack.c.b16 %v2432, %v2428
  %v2669 = vpack.c.b16 %v2433, %v2429
  %v2670 = vpack.c.b16 %v2438, %v2434
  %v2671 = vpack.c.b16 %v2439, %v2435
  %v2672 = vpack.c.b16 %v2440, %v2436
  %v2673 = vpack.c.b16 %v2441, %v2437
  %v2674 = vpack.c.b16 %v2446, %v2442
  %v2675 = vpack.c.b16 %v2447, %v2443
  %v2676 = vpack.c.b16 %v2448, %v2444
  %v2677 = vpack.c.b16 %v2449, %v2445
  %v2678 = vpack.c.b16 %v2454, %v2450
  %v2679 = vpack.c.b16 %v2455, %v2451
  %v2680 = vpack.c.b16 %v2456, %v2452
  %v2681 = vpack.c.b16 %v2457, %v2453
  %v2682 = vpack.c.b16 %v2462, %v2458
  %v2683 = vpack.c.b16 %v2463, %v2459
  %v2684 = vpack.c.b16 %v2464, %v2460
  %v2685 = vpack.c.b16 %v2465, %v2461
  %v2686 = vpack.c.b16 %v2470, %v2466
  %v2687 = vpack.c.b16 %v2471, %v2467
  %v2688 = vpack.c.b16 %v2472, %v2468
  %v2689 = vpack.c.b16 %v2473, %v2469
  %v2690 = vpack.c.b16 %v2478, %v2474
  %v2691 = vpack.c.b16 %v2479, %v2475
  %v2692 = vpack.c.b16 %v2480, %v2476
  %v2693 = vpack.c.b16 %v2481, %v2477
  %v2694 = vpack.c.b16 %v2486, %v2482
  %v2695 = vpack.c.b16 %v2487, %v2483
  %v2696 = vpack.c.b16 %v2488, %v2484
  %v2697 = vpack.c.b16 %v2489, %v2485
  %v2698 = vpack.c.b16 %v2494, %v2490
  %v2699 = vpack.c.b16 %v2495, %v2491
  %v2700 = vpack.c.b16 %v2496, %v2492
  %v2701 = vpack.c.b16 %v2497, %v2493
  %v2702 = vpack.c.b16 %v2502, %v2498
  %v2703 = vpack.c.b16 %v2503, %v2499
  %v2704 = vpack.c.b16 %v2504, %v2500
  %v2705 = vpack.c.b16 %v2505, %v2501
  %v2706 = vpack.c.b16 %v2510, %v2506
  %v2707 = vpack.c.b16 %v2511, %v2507
  %v2708 = vpack.c.b16 %v2512, %v2508
  %v2709 = vpack.c.b16 %v2513, %v2509
  %v2710 = vpack.c.b16 %v2518, %v2514
  %v2711 = vpack.c.b16 %v2519, %v2515
  %v2712 = vpack.c.b16 %v2520, %v2516
  %v2713 = vpack.c.b16 %v2521, %v2517
  %v2714 = vpack.c.b16 %v2526, %v2522
  %v2715 = vpack.c.b16 %v2527, %v2523
  %v2716 = vpack.c.b16 %v2528, %v2524
  %v2717 = vpack.c.b16 %v2529, %v2525
  %v2718 = vpack.c.b16 %v2534, %v2530
  %v2719 = vpack.c.b16 %v2535, %v2531
  %v2720 = vpack.c.b16 %v2536, %v2532
  %v2721 = vpack.c.b16 %v2537, %v2533
  %v2722 = vpack.c.b16 %v2542, %v2538
  %v2723 = vpack.c.b16 %v2543, %v2539
  %v2724 = vpack.c.b16 %v2544, %v2540
  %v2725 = vpack.c.b16 %v2545, %v2541
  %v2726 = vpack.c.b16 %v2550, %v2546
  %v2727 = vpack.c.b16 %v2551, %v2547
  %v2728 = vpack.c.b16 %v2552, %v2548
  %v2729 = vpack.c.b16 %v2553, %v2549
  %v2730 = vpack.c.b16 %v2558, %v2554
  %v2731 = vpack.c.b16 %v2559, %v2555
  %v2732 = vpack.c.b16 %v2560, %v2556
  %v2733 = vpack.c.b16 %v2561, %v2557
  %v2734 = vpack.c.b16 %v2566, %v2562
  %v2735 = vpack.c.b16 %v2567, %v2563
  %v2736 = vpack.c.b16 %v2568, %v2564
  %v2737 = vpack.c.b16 %v2569, %v2565
  %v2738 = vpack.c.b16 %v2574, %v2570
  %v2739 = vpack.c.b16 %v2575, %v2571
  %v2740 = vpack.c.b16 %v2576, %v2572
  %v2741 = vpack.c.b16 %v2577, %v2573
  %v2742 = vpack.c.b16 %v2582, %v2578
  %v2743 = vpack.c.b16 %v2583, %v2579
  %v2744 = vpack.c.b16 %v2584, %v2580
  %v2745 = vpack.c.b16 %v2585, %v2581
  %v2746 = vpack.c.b16 %v2590, %v2586
  %v2747 = vpack.c.b16 %v2591, %v2587
  %v2748 = vpack.c.b16 %v2592, %v2588
  %v2749 = vpack.c.b16 %v2593, %v2589
  %v2750 = vpack.c.b16 %v2598, %v2594
  %v2751 = vpack.c.b16 %v2599, %v2595
  %v2752 = vpack.c.b16 %v2600, %v2596
  %v2753 = vpack.c.b16 %v2601, %v2597
  %v2754 = vpack.c.b16 %v2606, %v2602
  %v2755 = vpack.c.b16 %v2607, %v2603
  %v2756 = vpack.c.b16 %v2608, %v2604
  %v2757 = vpack.c.b16 %v2609, %v2605
  %v2758 = vpack.c.b16 %v2614, %v2610
  %v2759 = vpack.c.b16 %v2615, %v2611
  %v2760 = vpack.c.b16 %v2616, %v2612
  %v2761 = vpack.c.b16 %v2617, %v2613
  %v2762 = vpack.c.b16 %v2622, %v2618
  %v2763 = vpack.c.b16 %v2623, %v2619
  %v2764 = vpack.c.b16 %v2624, %v2620
  %v2765 = vpack.c.b16 %v2625, %v2621
  %v2766 = vpack.c.b16 %v2630, %v2626
  %v2767 = vpack.c.b16 %v2631, %v2627
  %v2768 = vpack.c.b16 %v2632, %v2628
  %v2769 = vpack.c.b16 %v2633, %v2629
  %v2770 = vpack.c.b16 %v2638, %v2634
  %v2771 = vpack.c.b16 %v2639, %v2635
  %v2772 = vpack.c.b16 %v2640, %v2636
  %v2773 = vpack.c.b16 %v2641, %v2637
  %v2774 = vpack.c.b16 %v2646, %v2642
  %v2775 = vpack.c.b16 %v2647, %v2643
  %v2776 = vpack.c.b16 %v2648, %v2644
  %v2777 = vpack.c.b16 %v2649, %v2645
  %2906 = vmatprep.subr.bf16.mxu0 %v2679
  %2907 = vmatpush1.bf16.msra.mxu0 %v2678
  %2908 = vmatprep.subr.bf16.mxu0 %v2675
  %2909 = vmatpush1.bf16.msra.mxu0 %v2674
  %2910 = vmatprep.subr.bf16.mxu0 %v2671
  %2911 = vmatpush1.bf16.msra.mxu0 %v2670
  %2912 = vmatprep.subr.bf16.mxu0 %v2667
  %2913 = vmatpush1.bf16.msra.mxu0 %v2666
  %2914 = vmatprep.subr.bf16.mxu0 %v2663
  %2915 = vmatpush1.bf16.msra.mxu0 %v2662
  %2916 = vmatprep.subr.bf16.mxu0 %v2659
  %2917 = vmatpush1.bf16.msra.mxu0 %v2658
  %2918 = vmatprep.subr.bf16.mxu0 %v2655
  %2919 = vmatpush1.bf16.msra.mxu0 %v2654
  %2920 = vmatprep.subr.bf16.mxu0 %v2651
  %2921 = vmatpush1.bf16.msra.mxu0 %v2650
  %2922 = vmatprep.subr.bf16.mxu0 %v2711
  %2923 = vmatpush2.bf16.msra.mxu0 %v2710
  %2924 = vmatprep.subr.bf16.mxu0 %v2707
  %2925 = vmatpush2.bf16.msra.mxu0 %v2706
  %2926 = vmatprep.subr.bf16.mxu0 %v2703
  %2927 = vmatpush2.bf16.msra.mxu0 %v2702
  %2928 = vmatprep.subr.bf16.mxu0 %v2699
  %2929 = vmatpush2.bf16.msra.mxu0 %v2698
  %2930 = vmatprep.subr.bf16.mxu0 %v2695
  %2931 = vmatpush2.bf16.msra.mxu0 %v2694
  %2932 = vmatprep.subr.bf16.mxu0 %v2691
  %2933 = vmatpush2.bf16.msra.mxu0 %v2690
  %2934 = vmatprep.subr.bf16.mxu0 %v2687
  %2935 = vmatpush2.bf16.msra.mxu0 %v2686
  %2936 = vmatprep.subr.bf16.mxu0 %v2683
  %2937 = vmatpush2.bf16.msra.mxu0 %v2682
  %2938 = vmatprep.mubr.bf16.mxu0 %v2135
  %2939 = vmatmul.mubr.bf16.gmra.mxu0 %v2134
  %v2940 = vpop.f32.mrf.mxu0
  %v2941 = vadd.f32 0.0, %v2940
  %v2942 = vpop.f32.mrf.mxu0
  %v2943 = vadd.f32 0.0, %v2942
  %v2944 = vpop.f32.mrf.mxu0
  %v2945 = vadd.f32 0.0, %v2944
  %v2946 = vpop.f32.mrf.mxu0
  %v2947 = vadd.f32 0.0, %v2946
  %2948 = vdwg.mxu0
  %2949 = vmatprep.subr.bf16.mxu0 %v2743
  %2950 = vmatpush1.bf16.msra.mxu0 %v2742
  %2951 = vmatprep.subr.bf16.mxu0 %v2739
  %2952 = vmatpush1.bf16.msra.mxu0 %v2738
  %2953 = vmatprep.subr.bf16.mxu0 %v2735
  %2954 = vmatpush1.bf16.msra.mxu0 %v2734
  %2955 = vmatprep.subr.bf16.mxu0 %v2731
  %2956 = vmatpush1.bf16.msra.mxu0 %v2730
  %2957 = vmatprep.subr.bf16.mxu0 %v2727
  %2958 = vmatpush1.bf16.msra.mxu0 %v2726
  %2959 = vmatprep.subr.bf16.mxu0 %v2723
  %2960 = vmatpush1.bf16.msra.mxu0 %v2722
  %2961 = vmatprep.subr.bf16.mxu0 %v2719
  %2962 = vmatpush1.bf16.msra.mxu0 %v2718
  %2963 = vmatprep.subr.bf16.mxu0 %v2715
  %2964 = vmatpush1.bf16.msra.mxu0 %v2714
  %2965 = vmatprep.subr.bf16.mxu0 %v2775
  %2966 = vmatpush2.bf16.msra.mxu0 %v2774
  %2967 = vmatprep.subr.bf16.mxu0 %v2771
  %2968 = vmatpush2.bf16.msra.mxu0 %v2770
  %2969 = vmatprep.subr.bf16.mxu0 %v2767
  %2970 = vmatpush2.bf16.msra.mxu0 %v2766
  %2971 = vmatprep.subr.bf16.mxu0 %v2763
  %2972 = vmatpush2.bf16.msra.mxu0 %v2762
  %2973 = vmatprep.subr.bf16.mxu0 %v2759
  %2974 = vmatpush2.bf16.msra.mxu0 %v2758
  %2975 = vmatprep.subr.bf16.mxu0 %v2755
  %2976 = vmatpush2.bf16.msra.mxu0 %v2754
  %2977 = vmatprep.subr.bf16.mxu0 %v2751
  %2978 = vmatpush2.bf16.msra.mxu0 %v2750
  %2979 = vmatprep.subr.bf16.mxu0 %v2747
  %2980 = vmatpush2.bf16.msra.mxu0 %v2746
  %2981 = vmatprep.mubr.bf16.mxu0 %v2137
  %2982 = vmatmul.mubr.bf16.gmra.mxu0 %v2136
  %v2983 = vpop.f32.mrf.mxu0
  %v2984 = vadd.f32 %v2941, %v2983
  %v2985 = vpop.f32.mrf.mxu0
  %v2986 = vadd.f32 %v2943, %v2985
  %v2987 = vpop.f32.mrf.mxu0
  %v2988 = vadd.f32 %v2945, %v2987
  %v2989 = vpop.f32.mrf.mxu0
  %v2990 = vadd.f32 %v2947, %v2989
  %2991 = vdwg.mxu0
  %2992 = vmatprep.subr.bf16.mxu0 %v2681
  %2993 = vmatpush1.bf16.msra.mxu0 %v2680
  %2994 = vmatprep.subr.bf16.mxu0 %v2677
  %2995 = vmatpush1.bf16.msra.mxu0 %v2676
  %2996 = vmatprep.subr.bf16.mxu0 %v2673
  %2997 = vmatpush1.bf16.msra.mxu0 %v2672
  %2998 = vmatprep.subr.bf16.mxu0 %v2669
  %2999 = vmatpush1.bf16.msra.mxu0 %v2668
  %3000 = vmatprep.subr.bf16.mxu0 %v2665
  %3001 = vmatpush1.bf16.msra.mxu0 %v2664
  %3002 = vmatprep.subr.bf16.mxu0 %v2661
  %3003 = vmatpush1.bf16.msra.mxu0 %v2660
  %3004 = vmatprep.subr.bf16.mxu0 %v2657
  %3005 = vmatpush1.bf16.msra.mxu0 %v2656
  %3006 = vmatprep.subr.bf16.mxu0 %v2653
  %3007 = vmatpush1.bf16.msra.mxu0 %v2652
  %3008 = vmatprep.subr.bf16.mxu0 %v2713
  %3009 = vmatpush2.bf16.msra.mxu0 %v2712
  %3010 = vmatprep.subr.bf16.mxu0 %v2709
  %3011 = vmatpush2.bf16.msra.mxu0 %v2708
  %3012 = vmatprep.subr.bf16.mxu0 %v2705
  %3013 = vmatpush2.bf16.msra.mxu0 %v2704
  %3014 = vmatprep.subr.bf16.mxu0 %v2701
  %3015 = vmatpush2.bf16.msra.mxu0 %v2700
  %3016 = vmatprep.subr.bf16.mxu0 %v2697
  %3017 = vmatpush2.bf16.msra.mxu0 %v2696
  %3018 = vmatprep.subr.bf16.mxu0 %v2693
  %3019 = vmatpush2.bf16.msra.mxu0 %v2692
  %3020 = vmatprep.subr.bf16.mxu0 %v2689
  %3021 = vmatpush2.bf16.msra.mxu0 %v2688
  %3022 = vmatprep.subr.bf16.mxu0 %v2685
  %3023 = vmatpush2.bf16.msra.mxu0 %v2684
  %3024 = vmatprep.mubr.bf16.mxu0 %v2135
  %3025 = vmatmul.mubr.bf16.gmra.mxu0 %v2134
  %v3026 = vpop.f32.mrf.mxu0
  %v3027 = vadd.f32 0.0, %v3026
  %v3028 = vpop.f32.mrf.mxu0
  %v3029 = vadd.f32 0.0, %v3028
  %v3030 = vpop.f32.mrf.mxu0
  %v3031 = vadd.f32 0.0, %v3030
  %v3032 = vpop.f32.mrf.mxu0
  %v3033 = vadd.f32 0.0, %v3032
  %3034 = vdwg.mxu0
  %3035 = vmatprep.subr.bf16.mxu0 %v2745
  %3036 = vmatpush1.bf16.msra.mxu0 %v2744
  %3037 = vmatprep.subr.bf16.mxu0 %v2741
  %3038 = vmatpush1.bf16.msra.mxu0 %v2740
  %3039 = vmatprep.subr.bf16.mxu0 %v2737
  %3040 = vmatpush1.bf16.msra.mxu0 %v2736
  %3041 = vmatprep.subr.bf16.mxu0 %v2733
  %3042 = vmatpush1.bf16.msra.mxu0 %v2732
  %3043 = vmatprep.subr.bf16.mxu0 %v2729
  %3044 = vmatpush1.bf16.msra.mxu0 %v2728
  %3045 = vmatprep.subr.bf16.mxu0 %v2725
  %3046 = vmatpush1.bf16.msra.mxu0 %v2724
  %3047 = vmatprep.subr.bf16.mxu0 %v2721
  %3048 = vmatpush1.bf16.msra.mxu0 %v2720
  %3049 = vmatprep.subr.bf16.mxu0 %v2717
  %3050 = vmatpush1.bf16.msra.mxu0 %v2716
  %3051 = vmatprep.subr.bf16.mxu0 %v2777
  %3052 = vmatpush2.bf16.msra.mxu0 %v2776
  %3053 = vmatprep.subr.bf16.mxu0 %v2773
  %3054 = vmatpush2.bf16.msra.mxu0 %v2772
  %3055 = vmatprep.subr.bf16.mxu0 %v2769
  %3056 = vmatpush2.bf16.msra.mxu0 %v2768
  %3057 = vmatprep.subr.bf16.mxu0 %v2765
  %3058 = vmatpush2.bf16.msra.mxu0 %v2764
  %3059 = vmatprep.subr.bf16.mxu0 %v2761
  %3060 = vmatpush2.bf16.msra.mxu0 %v2760
  %3061 = vmatprep.subr.bf16.mxu0 %v2757
  %3062 = vmatpush2.bf16.msra.mxu0 %v2756
  %3063 = vmatprep.subr.bf16.mxu0 %v2753
  %3064 = vmatpush2.bf16.msra.mxu0 %v2752
  %3065 = vmatprep.subr.bf16.mxu0 %v2749
  %3066 = vmatpush2.bf16.msra.mxu0 %v2748
  %3067 = vmatprep.mubr.bf16.mxu0 %v2137
  %3068 = vmatmul.mubr.bf16.gmra.mxu0 %v2136
  %v3069 = vpop.f32.mrf.mxu0
  %v3070 = vadd.f32 %v3027, %v3069
  %v3071 = vpop.f32.mrf.mxu0
  %v3072 = vadd.f32 %v3029, %v3071
  %v3073 = vpop.f32.mrf.mxu0
  %v3074 = vadd.f32 %v3031, %v3073
  %v3075 = vpop.f32.mrf.mxu0
  %v3076 = vadd.f32 %v3033, %v3075
  %3077 = vdwg.mxu0
  %v3078 = vld [vmem:[%s4] sm:$0xf]
  %v3079 = vld [vmem:[%s4 + $0x4] sm:$0xf]
  %v3080 = vld [vmem:[%s4 + $0x8] sm:$0xf]
  %v3081 = vld [vmem:[%s4 + $0xc] sm:$0xf]
  %v3082 = vld [vmem:[%s4 + $0x10] sm:$0xf]
  %v3083 = vld [vmem:[%s4 + $0x14] sm:$0xf]
  %v3084 = vld [vmem:[%s4 + $0x18] sm:$0xf]
  %v3085 = vld [vmem:[%s4 + $0x1c] sm:$0xf]
  %v3086 = vld [vmem:[%s4 + $0x20] sm:$0xf]
  %v3087 = vld [vmem:[%s4 + $0x24] sm:$0xf]
  %v3088 = vld [vmem:[%s4 + $0x28] sm:$0xf]
  %v3089 = vld [vmem:[%s4 + $0x2c] sm:$0xf]
  %v3090 = vld [vmem:[%s4 + $0x30] sm:$0xf]
  %v3091 = vld [vmem:[%s4 + $0x34] sm:$0xf]
  %v3092 = vld [vmem:[%s4 + $0x38] sm:$0xf]
  %v3093 = vld [vmem:[%s4 + $0x3c] sm:$0xf]
  %v3094 = vpack.c.bf16 %v2988, %v2984
  %v3095 = vpack.c.bf16 %v2990, %v2986
  %v3096 = vpack.c.bf16 %v3074, %v3070
  %v3097 = vpack.c.bf16 %v3076, %v3072
  %v3114 = vunpack.c.l.b16 %v3078
  %v3115 = vunpack.c.l.b16 %v3079
  %v3116 = vunpack.c.l.b16 %v3080
  %v3117 = vunpack.c.l.b16 %v3081
  %v3118 = vunpack.c.l.b16 %v3082
  %v3119 = vunpack.c.l.b16 %v3083
  %v3120 = vunpack.c.l.b16 %v3084
  %v3121 = vunpack.c.l.b16 %v3085
  %v3122 = vunpack.c.l.b16 %v3086
  %v3123 = vunpack.c.l.b16 %v3087
  %v3124 = vunpack.c.l.b16 %v3088
  %v3125 = vunpack.c.l.b16 %v3089
  %v3126 = vunpack.c.l.b16 %v3090
  %v3127 = vunpack.c.l.b16 %v3091
  %v3128 = vunpack.c.l.b16 %v3092
  %v3129 = vunpack.c.l.b16 %v3093
  %v3130 = vpack.c.b16 %v3115, %v3114
  %v3131 = vpack.c.b16 %v3117, %v3116
  %v3132 = vpack.c.b16 %v3119, %v3118
  %v3133 = vpack.c.b16 %v3121, %v3120
  %v3134 = vpack.c.b16 %v3123, %v3122
  %v3135 = vpack.c.b16 %v3125, %v3124
  %v3136 = vpack.c.b16 %v3127, %v3126
  %v3137 = vpack.c.b16 %v3129, %v3128
  %vm3138 = vcmask 130048
  %v3140 = vsel %vm3138, %v3130, 0
  %v3143 = vsel %vm3138, %v3131, 0
  %v3146 = vsel %vm3138, %v3132, 0
  %v3149 = vsel %vm3138, %v3133, 0
  %v3152 = vsel %vm3138, %v3134, 0
  %v3155 = vsel %vm3138, %v3135, 0
  %v3158 = vsel %vm3138, %v3136, 0
  %v3161 = vsel %vm3138, %v3137, 0
  %3163 = vmatprep.subr.bf16.mxu0 0
  %3164 = vmatpush1.bf16.msra.mxu0 0
  %3165 = vmatprep.subr.bf16.mxu0 0
  %3166 = vmatpush1.bf16.msra.mxu0 0
  %3167 = vmatprep.subr.bf16.mxu0 0
  %3168 = vmatpush1.bf16.msra.mxu0 0
  %3169 = vmatprep.subr.bf16.mxu0 0
  %3170 = vmatpush1.bf16.msra.mxu0 0
  %3171 = vmatprep.subr.bf16.mxu0 0
  %3172 = vmatpush1.bf16.msra.mxu0 0
  %3173 = vmatprep.subr.bf16.mxu0 0
  %3174 = vmatpush1.bf16.msra.mxu0 0
  %3175 = vmatprep.subr.bf16.mxu0 0
  %3176 = vmatpush1.bf16.msra.mxu0 0
  %3177 = vmatprep.subr.bf16.mxu0 %v3095
  %3178 = vmatpush1.bf16.msra.mxu0 %v3094
  %3179 = vmatprep.subr.bf16.mxu0 0
  %3180 = vmatpush2.bf16.msra.mxu0 0
  %3181 = vmatprep.subr.bf16.mxu0 0
  %3182 = vmatpush2.bf16.msra.mxu0 0
  %3183 = vmatprep.subr.bf16.mxu0 0
  %3184 = vmatpush2.bf16.msra.mxu0 0
  %3185 = vmatprep.subr.bf16.mxu0 0
  %3186 = vmatpush2.bf16.msra.mxu0 0
  %3187 = vmatprep.subr.bf16.mxu0 0
  %3188 = vmatpush2.bf16.msra.mxu0 0
  %3189 = vmatprep.subr.bf16.mxu0 0
  %3190 = vmatpush2.bf16.msra.mxu0 0
  %3191 = vmatprep.subr.bf16.mxu0 0
  %3192 = vmatpush2.bf16.msra.mxu0 0
  %3193 = vmatprep.subr.bf16.mxu0 0
  %3194 = vmatpush2.bf16.msra.mxu0 0
  %3195 = vmatprep.mubr.bf16.mxu0 0
  %3196 = vmatmul.mubr.bf16.gmra.mxu0 %v3140
  %v3197 = vpop.f32.mrf.mxu0
  %v3198 = vadd.f32 0.0, %v3197
  %v3199 = vpop.f32.mrf.mxu0
  %v3200 = vadd.f32 0.0, %v3199
  %v3201 = vpop.f32.mrf.mxu0
  %v3202 = vadd.f32 0.0, %v3201
  %v3203 = vpop.f32.mrf.mxu0
  %v3204 = vadd.f32 0.0, %v3203
  %3205 = vmatprep.mubr.bf16.mxu0 0
  %3206 = vmatmul.mubr.bf16.gmra.mxu0 %v3143
  %v3207 = vpop.f32.mrf.mxu0
  %v3208 = vadd.f32 0.0, %v3207
  %v3209 = vpop.f32.mrf.mxu0
  %v3210 = vadd.f32 0.0, %v3209
  %v3211 = vpop.f32.mrf.mxu0
  %v3212 = vadd.f32 0.0, %v3211
  %v3213 = vpop.f32.mrf.mxu0
  %v3214 = vadd.f32 0.0, %v3213
  %3215 = vmatprep.mubr.bf16.mxu0 0
  %3216 = vmatmul.mubr.bf16.gmra.mxu0 %v3146
  %v3217 = vpop.f32.mrf.mxu0
  %v3218 = vadd.f32 0.0, %v3217
  %v3219 = vpop.f32.mrf.mxu0
  %v3220 = vadd.f32 0.0, %v3219
  %v3221 = vpop.f32.mrf.mxu0
  %v3222 = vadd.f32 0.0, %v3221
  %v3223 = vpop.f32.mrf.mxu0
  %v3224 = vadd.f32 0.0, %v3223
  %3225 = vmatprep.mubr.bf16.mxu0 0
  %3226 = vmatmul.mubr.bf16.gmra.mxu0 %v3149
  %v3227 = vpop.f32.mrf.mxu0
  %v3228 = vadd.f32 0.0, %v3227
  %v3229 = vpop.f32.mrf.mxu0
  %v3230 = vadd.f32 0.0, %v3229
  %v3231 = vpop.f32.mrf.mxu0
  %v3232 = vadd.f32 0.0, %v3231
  %v3233 = vpop.f32.mrf.mxu0
  %v3234 = vadd.f32 0.0, %v3233
  %3235 = vmatprep.mubr.bf16.mxu0 0
  %3236 = vmatmul.mubr.bf16.gmra.mxu0 %v3152
  %v3237 = vpop.f32.mrf.mxu0
  %v3238 = vadd.f32 0.0, %v3237
  %v3239 = vpop.f32.mrf.mxu0
  %v3240 = vadd.f32 0.0, %v3239
  %v3241 = vpop.f32.mrf.mxu0
  %v3242 = vadd.f32 0.0, %v3241
  %v3243 = vpop.f32.mrf.mxu0
  %v3244 = vadd.f32 0.0, %v3243
  %3245 = vmatprep.mubr.bf16.mxu0 0
  %3246 = vmatmul.mubr.bf16.gmra.mxu0 %v3155
  %v3247 = vpop.f32.mrf.mxu0
  %v3248 = vadd.f32 0.0, %v3247
  %v3249 = vpop.f32.mrf.mxu0
  %v3250 = vadd.f32 0.0, %v3249
  %v3251 = vpop.f32.mrf.mxu0
  %v3252 = vadd.f32 0.0, %v3251
  %v3253 = vpop.f32.mrf.mxu0
  %v3254 = vadd.f32 0.0, %v3253
  %3255 = vmatprep.mubr.bf16.mxu0 0
  %3256 = vmatmul.mubr.bf16.gmra.mxu0 %v3158
  %v3257 = vpop.f32.mrf.mxu0
  %v3258 = vadd.f32 0.0, %v3257
  %v3259 = vpop.f32.mrf.mxu0
  %v3260 = vadd.f32 0.0, %v3259
  %v3261 = vpop.f32.mrf.mxu0
  %v3262 = vadd.f32 0.0, %v3261
  %v3263 = vpop.f32.mrf.mxu0
  %v3264 = vadd.f32 0.0, %v3263
  %3265 = vmatprep.mubr.bf16.mxu0 0
  %3266 = vmatmul.mubr.bf16.gmra.mxu0 %v3161
  %v3267 = vpop.f32.mrf.mxu0
  %v3268 = vadd.f32 0.0, %v3267
  %v3269 = vpop.f32.mrf.mxu0
  %v3270 = vadd.f32 0.0, %v3269
  %v3271 = vpop.f32.mrf.mxu0
  %v3272 = vadd.f32 0.0, %v3271
  %v3273 = vpop.f32.mrf.mxu0
  %v3274 = vadd.f32 0.0, %v3273
  %3275 = vdwg.mxu0
  %3276 = vmatprep.subr.bf16.mxu0 0
  %3277 = vmatpush1.bf16.msra.mxu0 0
  %3278 = vmatprep.subr.bf16.mxu0 0
  %3279 = vmatpush1.bf16.msra.mxu0 0
  %3280 = vmatprep.subr.bf16.mxu0 0
  %3281 = vmatpush1.bf16.msra.mxu0 0
  %3282 = vmatprep.subr.bf16.mxu0 0
  %3283 = vmatpush1.bf16.msra.mxu0 0
  %3284 = vmatprep.subr.bf16.mxu0 0
  %3285 = vmatpush1.bf16.msra.mxu0 0
  %3286 = vmatprep.subr.bf16.mxu0 0
  %3287 = vmatpush1.bf16.msra.mxu0 0
  %3288 = vmatprep.subr.bf16.mxu0 0
  %3289 = vmatpush1.bf16.msra.mxu0 0
  %3290 = vmatprep.subr.bf16.mxu0 %v3097
  %3291 = vmatpush1.bf16.msra.mxu0 %v3096
  %3292 = vmatprep.subr.bf16.mxu0 0
  %3293 = vmatpush2.bf16.msra.mxu0 0
  %3294 = vmatprep.subr.bf16.mxu0 0
  %3295 = vmatpush2.bf16.msra.mxu0 0
  %3296 = vmatprep.subr.bf16.mxu0 0
  %3297 = vmatpush2.bf16.msra.mxu0 0
  %3298 = vmatprep.subr.bf16.mxu0 0
  %3299 = vmatpush2.bf16.msra.mxu0 0
  %3300 = vmatprep.subr.bf16.mxu0 0
  %3301 = vmatpush2.bf16.msra.mxu0 0
  %3302 = vmatprep.subr.bf16.mxu0 0
  %3303 = vmatpush2.bf16.msra.mxu0 0
  %3304 = vmatprep.subr.bf16.mxu0 0
  %3305 = vmatpush2.bf16.msra.mxu0 0
  %3306 = vmatprep.subr.bf16.mxu0 0
  %3307 = vmatpush2.bf16.msra.mxu0 0
  %3308 = vmatprep.mubr.bf16.mxu0 0
  %3309 = vmatmul.mubr.bf16.gmra.mxu0 %v3140
  %v3310 = vpop.f32.mrf.mxu0
  %v3311 = vadd.f32 0.0, %v3310
  %v3312 = vpop.f32.mrf.mxu0
  %v3313 = vadd.f32 0.0, %v3312
  %v3314 = vpop.f32.mrf.mxu0
  %v3315 = vadd.f32 0.0, %v3314
  %v3316 = vpop.f32.mrf.mxu0
  %v3317 = vadd.f32 0.0, %v3316
  %3318 = vmatprep.mubr.bf16.mxu0 0
  %3319 = vmatmul.mubr.bf16.gmra.mxu0 %v3143
  %v3320 = vpop.f32.mrf.mxu0
  %v3321 = vadd.f32 0.0, %v3320
  %v3322 = vpop.f32.mrf.mxu0
  %v3323 = vadd.f32 0.0, %v3322
  %v3324 = vpop.f32.mrf.mxu0
  %v3325 = vadd.f32 0.0, %v3324
  %v3326 = vpop.f32.mrf.mxu0
  %v3327 = vadd.f32 0.0, %v3326
  %3328 = vmatprep.mubr.bf16.mxu0 0
  %3329 = vmatmul.mubr.bf16.gmra.mxu0 %v3146
  %v3330 = vpop.f32.mrf.mxu0
  %v3331 = vadd.f32 0.0, %v3330
  %v3332 = vpop.f32.mrf.mxu0
  %v3333 = vadd.f32 0.0, %v3332
  %v3334 = vpop.f32.mrf.mxu0
  %v3335 = vadd.f32 0.0, %v3334
  %v3336 = vpop.f32.mrf.mxu0
  %v3337 = vadd.f32 0.0, %v3336
  %3338 = vmatprep.mubr.bf16.mxu0 0
  %3339 = vmatmul.mubr.bf16.gmra.mxu0 %v3149
  %v3340 = vpop.f32.mrf.mxu0
  %v3341 = vadd.f32 0.0, %v3340
  %v3342 = vpop.f32.mrf.mxu0
  %v3343 = vadd.f32 0.0, %v3342
  %v3344 = vpop.f32.mrf.mxu0
  %v3345 = vadd.f32 0.0, %v3344
  %v3346 = vpop.f32.mrf.mxu0
  %v3347 = vadd.f32 0.0, %v3346
  %3348 = vmatprep.mubr.bf16.mxu0 0
  %3349 = vmatmul.mubr.bf16.gmra.mxu0 %v3152
  %v3350 = vpop.f32.mrf.mxu0
  %v3351 = vadd.f32 0.0, %v3350
  %v3352 = vpop.f32.mrf.mxu0
  %v3353 = vadd.f32 0.0, %v3352
  %v3354 = vpop.f32.mrf.mxu0
  %v3355 = vadd.f32 0.0, %v3354
  %v3356 = vpop.f32.mrf.mxu0
  %v3357 = vadd.f32 0.0, %v3356
  %3358 = vmatprep.mubr.bf16.mxu0 0
  %3359 = vmatmul.mubr.bf16.gmra.mxu0 %v3155
  %v3360 = vpop.f32.mrf.mxu0
  %v3361 = vadd.f32 0.0, %v3360
  %v3362 = vpop.f32.mrf.mxu0
  %v3363 = vadd.f32 0.0, %v3362
  %v3364 = vpop.f32.mrf.mxu0
  %v3365 = vadd.f32 0.0, %v3364
  %v3366 = vpop.f32.mrf.mxu0
  %v3367 = vadd.f32 0.0, %v3366
  %3368 = vmatprep.mubr.bf16.mxu0 0
  %3369 = vmatmul.mubr.bf16.gmra.mxu0 %v3158
  %v3370 = vpop.f32.mrf.mxu0
  %v3371 = vadd.f32 0.0, %v3370
  %v3372 = vpop.f32.mrf.mxu0
  %v3373 = vadd.f32 0.0, %v3372
  %v3374 = vpop.f32.mrf.mxu0
  %v3375 = vadd.f32 0.0, %v3374
  %v3376 = vpop.f32.mrf.mxu0
  %v3377 = vadd.f32 0.0, %v3376
  %3378 = vmatprep.mubr.bf16.mxu0 0
  %3379 = vmatmul.mubr.bf16.gmra.mxu0 %v3161
  %v3380 = vpop.f32.mrf.mxu0
  %v3381 = vadd.f32 0.0, %v3380
  %v3382 = vpop.f32.mrf.mxu0
  %v3383 = vadd.f32 0.0, %v3382
  %v3384 = vpop.f32.mrf.mxu0
  %v3385 = vadd.f32 0.0, %v3384
  %v3386 = vpop.f32.mrf.mxu0
  %v3387 = vadd.f32 0.0, %v3386
  %3388 = vdwg.mxu0
  %3389 = vst [vmem:[%s5] sm:$0xff] %v3198
  %3390 = vst [vmem:[%s5 + $0x8] sm:$0xff] %v3200
  %3391 = vst [vmem:[%s5 + $0x10] sm:$0xff] %v3311
  %3392 = vst [vmem:[%s5 + $0x18] sm:$0xff] %v3313
  %3393 = vst [vmem:[%s5 + $0x20] sm:$0xff] %v3202
  %3394 = vst [vmem:[%s5 + $0x28] sm:$0xff] %v3204
  %3395 = vst [vmem:[%s5 + $0x30] sm:$0xff] %v3315
  %3396 = vst [vmem:[%s5 + $0x38] sm:$0xff] %v3317
  %3397 = vst [vmem:[%s5 + $0x40] sm:$0xff] %v3208
  %3398 = vst [vmem:[%s5 + $0x48] sm:$0xff] %v3210
  %3399 = vst [vmem:[%s5 + $0x50] sm:$0xff] %v3321
  %3400 = vst [vmem:[%s5 + $0x58] sm:$0xff] %v3323
  %3401 = vst [vmem:[%s5 + $0x60] sm:$0xff] %v3212
  %3402 = vst [vmem:[%s5 + $0x68] sm:$0xff] %v3214
  %3403 = vst [vmem:[%s5 + $0x70] sm:$0xff] %v3325
  %3404 = vst [vmem:[%s5 + $0x78] sm:$0xff] %v3327
  %3405 = vst [vmem:[%s5 + $0x80] sm:$0xff] %v3218
  %3406 = vst [vmem:[%s5 + $0x88] sm:$0xff] %v3220
  %3407 = vst [vmem:[%s5 + $0x90] sm:$0xff] %v3331
  %3408 = vst [vmem:[%s5 + $0x98] sm:$0xff] %v3333
  %3409 = vst [vmem:[%s5 + $0xa0] sm:$0xff] %v3222
  %3410 = vst [vmem:[%s5 + $0xa8] sm:$0xff] %v3224
  %3411 = vst [vmem:[%s5 + $0xb0] sm:$0xff] %v3335
  %3412 = vst [vmem:[%s5 + $0xb8] sm:$0xff] %v3337
  %3413 = vst [vmem:[%s5 + $0xc0] sm:$0xff] %v3228
  %3414 = vst [vmem:[%s5 + $0xc8] sm:$0xff] %v3230
  %3415 = vst [vmem:[%s5 + $0xd0] sm:$0xff] %v3341
  %3416 = vst [vmem:[%s5 + $0xd8] sm:$0xff] %v3343
  %3417 = vst [vmem:[%s5 + $0xe0] sm:$0xff] %v3232
  %3418 = vst [vmem:[%s5 + $0xe8] sm:$0xff] %v3234
  %3419 = vst [vmem:[%s5 + $0xf0] sm:$0xff] %v3345
  %3420 = vst [vmem:[%s5 + $0xf8] sm:$0xff] %v3347
  %3421 = vst [vmem:[%s5 + $0x100] sm:$0xff] %v3238
  %3422 = vst [vmem:[%s5 + $0x108] sm:$0xff] %v3240
  %3423 = vst [vmem:[%s5 + $0x110] sm:$0xff] %v3351
  %3424 = vst [vmem:[%s5 + $0x118] sm:$0xff] %v3353
  %3425 = vst [vmem:[%s5 + $0x120] sm:$0xff] %v3242
  %3426 = vst [vmem:[%s5 + $0x128] sm:$0xff] %v3244
  %3427 = vst [vmem:[%s5 + $0x130] sm:$0xff] %v3355
  %3428 = vst [vmem:[%s5 + $0x138] sm:$0xff] %v3357
  %3429 = vst [vmem:[%s5 + $0x140] sm:$0xff] %v3248
  %3430 = vst [vmem:[%s5 + $0x148] sm:$0xff] %v3250
  %3431 = vst [vmem:[%s5 + $0x150] sm:$0xff] %v3361
  %3432 = vst [vmem:[%s5 + $0x158] sm:$0xff] %v3363
  %3433 = vst [vmem:[%s5 + $0x160] sm:$0xff] %v3252
  %3434 = vst [vmem:[%s5 + $0x168] sm:$0xff] %v3254
  %3435 = vst [vmem:[%s5 + $0x170] sm:$0xff] %v3365
  %3436 = vst [vmem:[%s5 + $0x178] sm:$0xff] %v3367
  %3437 = vst [vmem:[%s5 + $0x180] sm:$0xff] %v3258
  %3438 = vst [vmem:[%s5 + $0x188] sm:$0xff] %v3260
  %3439 = vst [vmem:[%s5 + $0x190] sm:$0xff] %v3371
  %3440 = vst [vmem:[%s5 + $0x198] sm:$0xff] %v3373
  %3441 = vst [vmem:[%s5 + $0x1a0] sm:$0xff] %v3262
  %3442 = vst [vmem:[%s5 + $0x1a8] sm:$0xff] %v3264
  %3443 = vst [vmem:[%s5 + $0x1b0] sm:$0xff] %v3375
  %3444 = vst [vmem:[%s5 + $0x1b8] sm:$0xff] %v3377
  %3445 = vst [vmem:[%s5 + $0x1c0] sm:$0xff] %v3268
  %3446 = vst [vmem:[%s5 + $0x1c8] sm:$0xff] %v3270
  %3447 = vst [vmem:[%s5 + $0x1d0] sm:$0xff] %v3381
  %3448 = vst [vmem:[%s5 + $0x1d8] sm:$0xff] %v3383
  %3449 = vst [vmem:[%s5 + $0x1e0] sm:$0xff] %v3272
  %3450 = vst [vmem:[%s5 + $0x1e8] sm:$0xff] %v3274
  %3451 = vst [vmem:[%s5 + $0x1f0] sm:$0xff] %v3385
  %3452 = vst [vmem:[%s5 + $0x1f8] sm:$0xff] %v3387
  // Predicated region
  $region22: #{multitask_swin_forward.1} parent=0 // pred_check
    _
  $region23: #{multitask_swin_forward.1} parent=0 // pred_check_branch
    %3454 = sbr.rel (0) target = $region25
  $region24: #{multitask_swin_forward.1} parent=0 // pred_region
    _
  $region25: #{multitask_swin_forward.1} parent=0 // pred_fallthru
    _
  // Predicated region
  $region26: #{multitask_swin_forward.1} parent=0 // pred_check
    _
  $region27: #{multitask_swin_forward.1} parent=0 // pred_check_branch
    %3456 = sbr.rel (0) target = $region29
  $region28: #{multitask_swin_forward.1} parent=0 // pred_region
    _
  $region29: #{multitask_swin_forward.1} parent=0 // pred_fallthru
    _

</llo_original>
